<compile_context>
chip_gen: v6e
topology: v6e:2x2x1
jax: 0.10.0
libtpu: 0.0.40
codegen_flags: <defaults>
</compile_context>

<pallas_src>
import functools

import jax
import jax.numpy as jnp
from jax import lax
from jax.experimental import pallas as pl
from jax.experimental.pallas import tpu as pltpu


def _ngcu_kernel(x_ref, wih_ref, whh_ref, bih_ref, bhh_ref,
                 whead_ref, bhead_ref, wcs_ref, bcs_ref,
                 o_ref, h_ref, *, t_chunk, seq_len, hidden):
    # x_ref    : (T_CHUNK, B, D)  input slab for this time chunk
    # wih_ref  : (D, 3H)  GRU input->gates weights  (pre-transposed, gate order r|z|n)
    # whh_ref  : (H, 3H)  GRU hidden->gates weights (pre-transposed)
    # bih_ref  : (1, 3H)  GRU input bias
    # bhh_ref  : (1, 3H)  GRU hidden bias
    # whead_ref: (H, 2H)  [linear_influence | linear_gate] weights (pre-transposed, fused)
    # bhead_ref: (1, 2H)  fused head bias
    # wcs_ref  : (H, 1), bcs_ref: (1, 1)  linear_causality_score
    # o_ref    : (B, 1)   final causality score
    # h_ref    : (B, H) f32 VMEM scratch holding the recurrent hidden state
    c = pl.program_id(0)
    n_chunks = pl.num_programs(0)
    H = hidden

    @pl.when(c == 0)
    def _init():
        h_ref[...] = jnp.zeros_like(h_ref)

    # Hoist weight/bias reads out of the time loop.
    wih = wih_ref[...]
    whh = whh_ref[...]
    bih = bih_ref[...]
    bhh = bhh_ref[...]

    def step(i, h):
        x_t = x_ref[i]                                               # (B, D)
        gi = jnp.dot(x_t, wih, preferred_element_type=jnp.float32) + bih
        gh = jnp.dot(h, whh, preferred_element_type=jnp.float32) + bhh
        r = jax.nn.sigmoid(gi[:, :H] + gh[:, :H])
        z = jax.nn.sigmoid(gi[:, H:2 * H] + gh[:, H:2 * H])
        n = jnp.tanh(gi[:, 2 * H:] + r * gh[:, 2 * H:])
        h_new = (1.0 - z) * n + z * h
        if seq_len % t_chunk != 0:
            # Freeze h on zero-padded timesteps past the true sequence end.
            h_new = jnp.where(c * t_chunk + i < seq_len, h_new, h)
        return h_new

    h = lax.fori_loop(0, t_chunk, step, h_ref[...], unroll=True)
    h_ref[...] = h

    # The causality head only matters on the final hidden state.
    @pl.when(c == n_chunks - 1)
    def _head():
        hg = jnp.dot(h, whead_ref[...],
                     preferred_element_type=jnp.float32) + bhead_ref[...]
        inf = jnp.tanh(hg[:, :H])
        gate = jax.nn.sigmoid(hg[:, H:])
        cs = jax.nn.sigmoid(
            jnp.dot(inf * gate, wcs_ref[...],
                    preferred_element_type=jnp.float32) + bcs_ref[...])
        o_ref[...] = cs.astype(o_ref.dtype)


def ngcu_forward(x, params, *, t_chunk=None):
    """x: (B, T, D) float32. params: PyTorch-layout NGCU parameters.

    Returns (B, 1) -- identical to the PyTorch module's forward output.
    """
    B, T, D = x.shape
    H = params["b_inf"].shape[0]

    if t_chunk is None:
        t_chunk = min(T, 128)              # amortize grid-step overhead; tiny VMEM tile
    n_chunks = pl.cdiv(T, t_chunk)
    T_pad = n_chunks * t_chunk

    # --- one-time wrapper-side layout prep (done in XLA, not per grid step) ---
    x_tbd = jnp.transpose(x, (1, 0, 2))                 # (T, B, D): contiguous per-step tiles
    if T_pad != T:
        x_tbd = jnp.pad(x_tbd, ((0, T_pad - T), (0, 0), (0, 0)))
    w_ih = jnp.transpose(params["w_ih"])                # (D, 3H)
    w_hh = jnp.transpose(params["w_hh"])                # (H, 3H)
    b_ih = params["b_ih"].reshape(1, 3 * H)
    b_hh = params["b_hh"].reshape(1, 3 * H)
    # Fuse influence + gate linears into one (H, 2H) contraction.
    w_head = jnp.concatenate(
        [jnp.transpose(params["w_inf"]), jnp.transpose(params["w_gate"])], axis=1)
    b_head = jnp.concatenate(
        [params["b_inf"], params["b_gate"]]).reshape(1, 2 * H)
    w_cs = jnp.transpose(params["w_cs"])                # (H, 1)
    b_cs = params["b_cs"].reshape(1, 1)

    flops_per_step = 2 * B * D * 3 * H + 2 * B * H * 3 * H + 12 * B * H
    head_flops = 2 * B * H * 2 * H + 2 * B * H + 6 * B * H
    cost = pl.CostEstimate(
        flops=T * flops_per_step + head_flops,
        transcendentals=T * 3 * B * H + 2 * B * H + B,
        bytes_accessed=(x_tbd.size + w_ih.size + w_hh.size + b_ih.size + b_hh.size
                        + w_head.size + b_head.size + w_cs.size + b_cs.size + B) * 4,
    )

    weight_spec_2d = lambda shape: pl.BlockSpec(shape, lambda c: (0, 0))

    kernel = functools.partial(_ngcu_kernel, t_chunk=t_chunk, seq_len=T, hidden=H)

    out = pl.pallas_call(
        kernel,
        out_shape=jax.ShapeDtypeStruct((B, 1), x.dtype),
        grid_spec=pltpu.PrefetchScalarGridSpec(
            num_scalar_prefetch=0,
            grid=(n_chunks,),
            in_specs=[
                pl.BlockSpec((t_chunk, B, D), lambda c: (c, 0, 0)),  # x chunk
                weight_spec_2d((D, 3 * H)),                          # w_ih
                weight_spec_2d((H, 3 * H)),                          # w_hh
                weight_spec_2d((1, 3 * H)),                          # b_ih
                weight_spec_2d((1, 3 * H)),                          # b_hh
                weight_spec_2d((H, 2 * H)),                          # w_head (inf|gate)
                weight_spec_2d((1, 2 * H)),                          # b_head
                weight_spec_2d((H, 1)),                              # w_cs
                weight_spec_2d((1, 1)),                              # b_cs
            ],
            out_specs=pl.BlockSpec((B, 1), lambda c: (0, 0)),
            scratch_shapes=[pltpu.VMEM((B, H), jnp.float32)],        # recurrent hidden state
        ),
        compiler_params=pltpu.CompilerParams(
            dimension_semantics=("arbitrary",)),                     # recurrence: serial over T
        cost_estimate=cost,
    )(x_tbd, w_ih, w_hh, b_ih, b_hh, w_head, b_head, w_cs, b_cs)
    return out


def _ngcu_reference(x, p):
    """Plain-JAX reference matching the PyTorch forward (for correctness check)."""
    B, T, D = x.shape
    H = p["b_inf"].shape[0]
    h = jnp.zeros((B, H), jnp.float32)
    for t in range(T):
        xt = x[:, t, :]
        gi = xt @ p["w_ih"].T + p["b_ih"]
        gh = h @ p["w_hh"].T + p["b_hh"]
        r = jax.nn.sigmoid(gi[:, :H] + gh[:, :H])
        z = jax.nn.sigmoid(gi[:, H:2 * H] + gh[:, H:2 * H])
        n = jnp.tanh(gi[:, 2 * H:] + r * gh[:, 2 * H:])
        h = (1.0 - z) * n + z * h
    inf = jnp.tanh(h @ p["w_inf"].T + p["b_inf"])
    gate = jax.nn.sigmoid(h @ p["w_gate"].T + p["b_gate"])
    cs = jax.nn.sigmoid((inf * gate) @ p["w_cs"].T + p["b_cs"])
    return cs  # (B, 1)


if __name__ == "__main__":
    # Small shapes consistent with the module: batch=2, seq=8, input_dim=4, hidden=16.
    B, T, D, H = 2, 8, 4, 16

    key = jax.random.PRNGKey(0)
    keys = jax.random.split(key, 12)

    # PyTorch-style U(-k, k) init (k = 1/sqrt(fan)) — deterministic.
    k_gru = 1.0 / (H ** 0.5)
    k_lin = 1.0 / (H ** 0.5)
    params = {
        "w_ih": jax.random.uniform(keys[0], (3 * H, D), jnp.float32, -k_gru, k_gru),
        "w_hh": jax.random.uniform(keys[1], (3 * H, H), jnp.float32, -k_gru, k_gru),
        "b_ih": jax.random.uniform(keys[2], (3 * H,), jnp.float32, -k_gru, k_gru),
        "b_hh": jax.random.uniform(keys[3], (3 * H,), jnp.float32, -k_gru, k_gru),
        "w_inf": jax.random.uniform(keys[4], (H, H), jnp.float32, -k_lin, k_lin),
        "b_inf": jax.random.uniform(keys[5], (H,), jnp.float32, -k_lin, k_lin),
        "w_gate": jax.random.uniform(keys[6], (H, H), jnp.float32, -k_lin, k_lin),
        "b_gate": jax.random.uniform(keys[7], (H,), jnp.float32, -k_lin, k_lin),
        "w_cs": jax.random.uniform(keys[8], (1, H), jnp.float32, -k_lin, k_lin),
        "b_cs": jax.random.uniform(keys[9], (1,), jnp.float32, -k_lin, k_lin),
    }
    x = jax.random.normal(keys[10], (B, T, D), jnp.float32)

    y = ngcu_forward(x, params)
    y = jax.block_until_ready(y)

    y_ref = _ngcu_reference(x, params)
    assert y.shape == (B, 1), y.shape
    assert jnp.allclose(y, y_ref, atol=1e-5, rtol=1e-5), "mismatch vs reference"

    # Also exercise the chunk-remainder (masking) path: T not divisible by chunk.
    y2 = jax.block_until_ready(ngcu_forward(x, params, t_chunk=3))
    assert jnp.allclose(y2, y_ref, atol=1e-5, rtol=1e-5), "mismatch (chunked path)"

    print("KERNEL_OK")
</pallas_src>

<mosaic_0001>
module attributes {stable_mosaic.version = 11 : i64} {
  func.func @_ngcu_kernel(%arg0: i32, %arg1: memref<8x2x4xf32, #tpu.memory_space<vmem>>, %arg2: memref<4x48xf32, #tpu.memory_space<vmem>>, %arg3: memref<16x48xf32, #tpu.memory_space<vmem>>, %arg4: memref<1x48xf32, #tpu.memory_space<vmem>>, %arg5: memref<1x48xf32, #tpu.memory_space<vmem>>, %arg6: memref<16x32xf32, #tpu.memory_space<vmem>>, %arg7: memref<1x32xf32, #tpu.memory_space<vmem>>, %arg8: memref<16x1xf32, #tpu.memory_space<vmem>>, %arg9: memref<1x1xf32, #tpu.memory_space<vmem>>, %arg10: memref<2x1xf32, #tpu.memory_space<vmem>>, %arg11: memref<2x16xf32, #tpu.memory_space<vmem>>) attributes {dimension_semantics = [#tpu.dimension_semantics<arbitrary>], iteration_bounds = array<i64: 1>, scalar_prefetch = 0 : i64, scratch_operands = 1 : i64, tpu.core_type = #tpu.core_type<tc>, window_params = [{transform_indices = @transform_0, window_bounds = array<i64: 8, 2, 4>}, {pipeline_mode = #tpu.pipeline_mode<synchronous>, transform_indices = @transform_1, window_bounds = array<i64: 4, 48>}, {pipeline_mode = #tpu.pipeline_mode<synchronous>, transform_indices = @transform_2, window_bounds = array<i64: 16, 48>}, {pipeline_mode = #tpu.pipeline_mode<synchronous>, transform_indices = @transform_3, window_bounds = array<i64: 1, 48>}, {pipeline_mode = #tpu.pipeline_mode<synchronous>, transform_indices = @transform_4, window_bounds = array<i64: 1, 48>}, {pipeline_mode = #tpu.pipeline_mode<synchronous>, transform_indices = @transform_5, window_bounds = array<i64: 16, 32>}, {pipeline_mode = #tpu.pipeline_mode<synchronous>, transform_indices = @transform_6, window_bounds = array<i64: 1, 32>}, {pipeline_mode = #tpu.pipeline_mode<synchronous>, transform_indices = @transform_7, window_bounds = array<i64: 16, 1>}, {pipeline_mode = #tpu.pipeline_mode<synchronous>, transform_indices = @transform_8, window_bounds = array<i64: 1, 1>}, {pipeline_mode = #tpu.pipeline_mode<synchronous>, transform_indices = @transform_9, window_bounds = array<i64: 2, 1>}]} {
    %c0_i32 = arith.constant 0 : i32
    %0 = arith.cmpi eq, %arg0, %c0_i32 : i32
    %1 = arith.extui %0 : i1 to i32
    %c0_i32_0 = arith.constant 0 : i32
    %2 = arith.cmpi ne, %1, %c0_i32_0 : i32
    scf.if %2 {
      %cst_70 = arith.constant 0.000000e+00 : f32
      %292 = vector.broadcast %cst_70 : f32 to vector<2x16xf32>
      %c0_71 = arith.constant 0 : index
      %c0_72 = arith.constant 0 : index
      %293 = vector.load %arg11[%c0_71, %c0_72] : memref<2x16xf32, #tpu.memory_space<vmem>>, vector<2x16xf32>
      tpu.vector_store %arg11[%c0_71, %c0_72], %292 {strides = array<i32>} : memref<2x16xf32, #tpu.memory_space<vmem>>, vector<2x16xf32>,
    } else {
    }
    %c0 = arith.constant 0 : index
    %c0_1 = arith.constant 0 : index
    %3 = vector.load %arg2[%c0, %c0_1] : memref<4x48xf32, #tpu.memory_space<vmem>>, vector<4x48xf32>
    %c0_2 = arith.constant 0 : index
    %c0_3 = arith.constant 0 : index
    %4 = vector.load %arg3[%c0_2, %c0_3] : memref<16x48xf32, #tpu.memory_space<vmem>>, vector<16x48xf32>
    %c0_4 = arith.constant 0 : index
    %c0_5 = arith.constant 0 : index
    %5 = vector.load %arg4[%c0_4, %c0_5] : memref<1x48xf32, #tpu.memory_space<vmem>>, vector<1x48xf32>
    %c0_6 = arith.constant 0 : index
    %c0_7 = arith.constant 0 : index
    %6 = vector.load %arg5[%c0_6, %c0_7] : memref<1x48xf32, #tpu.memory_space<vmem>>, vector<1x48xf32>
    %c0_8 = arith.constant 0 : index
    %c0_9 = arith.constant 0 : index
    %7 = vector.load %arg11[%c0_8, %c0_9] : memref<2x16xf32, #tpu.memory_space<vmem>>, vector<2x16xf32>
    %c0_i32_10 = arith.constant 0 : i32
    %8 = arith.index_cast %c0_i32_10 : i32 to index
    %c0_11 = arith.constant 0 : index
    %c0_12 = arith.constant 0 : index
    %9 = vector.load %arg1[%8, %c0_11, %c0_12] : memref<8x2x4xf32, #tpu.memory_space<vmem>>, vector<1x2x4xf32>
    %10 = vector.shape_cast %9 : vector<1x2x4xf32> to vector<2x4xf32>
    %cst = arith.constant dense<0.000000e+00> : vector<2x48xf32>
    %11 = tpu.matmul %10, %3, %cst {dimension_numbers = #tpu.dot_dimension_numbers<[1], [0], [0], [1], [0, 0, 1, 1], [], []>} : vector<2x4xf32>, vector<4x48xf32>, vector<2x48xf32> -> vector<2x48xf32>
    %12 = vector.broadcast %5 : vector<1x48xf32> to vector<2x48xf32>
    %13 = arith.addf %11, %12 : vector<2x48xf32>
    %cst_13 = arith.constant dense<0.000000e+00> : vector<2x48xf32>
    %14 = tpu.matmul %7, %4, %cst_13 {dimension_numbers = #tpu.dot_dimension_numbers<[1], [0], [0], [1], [0, 0, 1, 1], [], []>} : vector<2x16xf32>, vector<16x48xf32>, vector<2x48xf32> -> vector<2x48xf32>
    %15 = vector.broadcast %6 : vector<1x48xf32> to vector<2x48xf32>
    %16 = arith.addf %14, %15 : vector<2x48xf32>
    %17 = vector.extract_strided_slice %13 {offsets = [0, 0], sizes = [2, 16], strides = [1, 1]} : vector<2x48xf32> to vector<2x16xf32>
    %18 = vector.extract_strided_slice %16 {offsets = [0, 0], sizes = [2, 16], strides = [1, 1]} : vector<2x48xf32> to vector<2x16xf32>
    %19 = arith.addf %17, %18 : vector<2x16xf32>
    %20 = arith.negf %19 : vector<2x16xf32>
    %21 = math.exp %20 : vector<2x16xf32>
    %cst_14 = arith.constant 1.000000e+00 : f32
    %22 = vector.broadcast %cst_14 : f32 to vector<2x16xf32>
    %23 = arith.addf %22, %21 : vector<2x16xf32>
    %24 = arith.divf %22, %23 : vector<2x16xf32>
    %25 = vector.extract_strided_slice %13 {offsets = [0, 16], sizes = [2, 16], strides = [1, 1]} : vector<2x48xf32> to vector<2x16xf32>
    %26 = vector.extract_strided_slice %16 {offsets = [0, 16], sizes = [2, 16], strides = [1, 1]} : vector<2x48xf32> to vector<2x16xf32>
    %27 = arith.addf %25, %26 : vector<2x16xf32>
    %28 = arith.negf %27 : vector<2x16xf32>
    %29 = math.exp %28 : vector<2x16xf32>
    %cst_15 = arith.constant 1.000000e+00 : f32
    %30 = vector.broadcast %cst_15 : f32 to vector<2x16xf32>
    %31 = arith.addf %30, %29 : vector<2x16xf32>
    %32 = arith.divf %30, %31 : vector<2x16xf32>
    %33 = vector.extract_strided_slice %13 {offsets = [0, 32], sizes = [2, 16], strides = [1, 1]} : vector<2x48xf32> to vector<2x16xf32>
    %34 = vector.extract_strided_slice %16 {offsets = [0, 32], sizes = [2, 16], strides = [1, 1]} : vector<2x48xf32> to vector<2x16xf32>
    %35 = arith.mulf %24, %34 : vector<2x16xf32>
    %36 = arith.addf %33, %35 : vector<2x16xf32>
    %37 = math.tanh %36 : vector<2x16xf32>
    %cst_16 = arith.constant 1.000000e+00 : f32
    %38 = vector.broadcast %cst_16 : f32 to vector<2x16xf32>
    %39 = arith.subf %38, %32 : vector<2x16xf32>
    %40 = arith.mulf %39, %37 : vector<2x16xf32>
    %41 = arith.mulf %32, %7 : vector<2x16xf32>
    %42 = arith.addf %40, %41 : vector<2x16xf32>
    %c1_i32 = arith.constant 1 : i32
    %43 = arith.index_cast %c1_i32 : i32 to index
    %c0_17 = arith.constant 0 : index
    %c0_18 = arith.constant 0 : index
    %44 = vector.load %arg1[%43, %c0_17, %c0_18] : memref<8x2x4xf32, #tpu.memory_space<vmem>>, vector<1x2x4xf32>
    %45 = vector.shape_cast %44 : vector<1x2x4xf32> to vector<2x4xf32>
    %cst_19 = arith.constant dense<0.000000e+00> : vector<2x48xf32>
    %46 = tpu.matmul %45, %3, %cst_19 {dimension_numbers = #tpu.dot_dimension_numbers<[1], [0], [0], [1], [0, 0, 1, 1], [], []>} : vector<2x4xf32>, vector<4x48xf32>, vector<2x48xf32> -> vector<2x48xf32>
    %47 = vector.broadcast %5 : vector<1x48xf32> to vector<2x48xf32>
    %48 = arith.addf %46, %47 : vector<2x48xf32>
    %cst_20 = arith.constant dense<0.000000e+00> : vector<2x48xf32>
    %49 = tpu.matmul %42, %4, %cst_20 {dimension_numbers = #tpu.dot_dimension_numbers<[1], [0], [0], [1], [0, 0, 1, 1], [], []>} : vector<2x16xf32>, vector<16x48xf32>, vector<2x48xf32> -> vector<2x48xf32>
    %50 = vector.broadcast %6 : vector<1x48xf32> to vector<2x48xf32>
    %51 = arith.addf %49, %50 : vector<2x48xf32>
    %52 = vector.extract_strided_slice %48 {offsets = [0, 0], sizes = [2, 16], strides = [1, 1]} : vector<2x48xf32> to vector<2x16xf32>
    %53 = vector.extract_strided_slice %51 {offsets = [0, 0], sizes = [2, 16], strides = [1, 1]} : vector<2x48xf32> to vector<2x16xf32>
    %54 = arith.addf %52, %53 : vector<2x16xf32>
    %55 = arith.negf %54 : vector<2x16xf32>
    %56 = math.exp %55 : vector<2x16xf32>
    %cst_21 = arith.constant 1.000000e+00 : f32
    %57 = vector.broadcast %cst_21 : f32 to vector<2x16xf32>
    %58 = arith.addf %57, %56 : vector<2x16xf32>
    %59 = arith.divf %57, %58 : vector<2x16xf32>
    %60 = vector.extract_strided_slice %48 {offsets = [0, 16], sizes = [2, 16], strides = [1, 1]} : vector<2x48xf32> to vector<2x16xf32>
    %61 = vector.extract_strided_slice %51 {offsets = [0, 16], sizes = [2, 16], strides = [1, 1]} : vector<2x48xf32> to vector<2x16xf32>
    %62 = arith.addf %60, %61 : vector<2x16xf32>
    %63 = arith.negf %62 : vector<2x16xf32>
    %64 = math.exp %63 : vector<2x16xf32>
    %cst_22 = arith.constant 1.000000e+00 : f32
    %65 = vector.broadcast %cst_22 : f32 to vector<2x16xf32>
    %66 = arith.addf %65, %64 : vector<2x16xf32>
    %67 = arith.divf %65, %66 : vector<2x16xf32>
    %68 = vector.extract_strided_slice %48 {offsets = [0, 32], sizes = [2, 16], strides = [1, 1]} : vector<2x48xf32> to vector<2x16xf32>
    %69 = vector.extract_strided_slice %51 {offsets = [0, 32], sizes = [2, 16], strides = [1, 1]} : vector<2x48xf32> to vector<2x16xf32>
    %70 = arith.mulf %59, %69 : vector<2x16xf32>
    %71 = arith.addf %68, %70 : vector<2x16xf32>
    %72 = math.tanh %71 : vector<2x16xf32>
    %cst_23 = arith.constant 1.000000e+00 : f32
    %73 = vector.broadcast %cst_23 : f32 to vector<2x16xf32>
    %74 = arith.subf %73, %67 : vector<2x16xf32>
    %75 = arith.mulf %74, %72 : vector<2x16xf32>
    %76 = arith.mulf %67, %42 : vector<2x16xf32>
    %77 = arith.addf %75, %76 : vector<2x16xf32>
    %c2_i32 = arith.constant 2 : i32
    %78 = arith.index_cast %c2_i32 : i32 to index
    %c0_24 = arith.constant 0 : index
    %c0_25 = arith.constant 0 : index
    %79 = vector.load %arg1[%78, %c0_24, %c0_25] : memref<8x2x4xf32, #tpu.memory_space<vmem>>, vector<1x2x4xf32>
    %80 = vector.shape_cast %79 : vector<1x2x4xf32> to vector<2x4xf32>
    %cst_26 = arith.constant dense<0.000000e+00> : vector<2x48xf32>
    %81 = tpu.matmul %80, %3, %cst_26 {dimension_numbers = #tpu.dot_dimension_numbers<[1], [0], [0], [1], [0, 0, 1, 1], [], []>} : vector<2x4xf32>, vector<4x48xf32>, vector<2x48xf32> -> vector<2x48xf32>
    %82 = vector.broadcast %5 : vector<1x48xf32> to vector<2x48xf32>
    %83 = arith.addf %81, %82 : vector<2x48xf32>
    %cst_27 = arith.constant dense<0.000000e+00> : vector<2x48xf32>
    %84 = tpu.matmul %77, %4, %cst_27 {dimension_numbers = #tpu.dot_dimension_numbers<[1], [0], [0], [1], [0, 0, 1, 1], [], []>} : vector<2x16xf32>, vector<16x48xf32>, vector<2x48xf32> -> vector<2x48xf32>
    %85 = vector.broadcast %6 : vector<1x48xf32> to vector<2x48xf32>
    %86 = arith.addf %84, %85 : vector<2x48xf32>
    %87 = vector.extract_strided_slice %83 {offsets = [0, 0], sizes = [2, 16], strides = [1, 1]} : vector<2x48xf32> to vector<2x16xf32>
    %88 = vector.extract_strided_slice %86 {offsets = [0, 0], sizes = [2, 16], strides = [1, 1]} : vector<2x48xf32> to vector<2x16xf32>
    %89 = arith.addf %87, %88 : vector<2x16xf32>
    %90 = arith.negf %89 : vector<2x16xf32>
    %91 = math.exp %90 : vector<2x16xf32>
    %cst_28 = arith.constant 1.000000e+00 : f32
    %92 = vector.broadcast %cst_28 : f32 to vector<2x16xf32>
    %93 = arith.addf %92, %91 : vector<2x16xf32>
    %94 = arith.divf %92, %93 : vector<2x16xf32>
    %95 = vector.extract_strided_slice %83 {offsets = [0, 16], sizes = [2, 16], strides = [1, 1]} : vector<2x48xf32> to vector<2x16xf32>
    %96 = vector.extract_strided_slice %86 {offsets = [0, 16], sizes = [2, 16], strides = [1, 1]} : vector<2x48xf32> to vector<2x16xf32>
    %97 = arith.addf %95, %96 : vector<2x16xf32>
    %98 = arith.negf %97 : vector<2x16xf32>
    %99 = math.exp %98 : vector<2x16xf32>
    %cst_29 = arith.constant 1.000000e+00 : f32
    %100 = vector.broadcast %cst_29 : f32 to vector<2x16xf32>
    %101 = arith.addf %100, %99 : vector<2x16xf32>
    %102 = arith.divf %100, %101 : vector<2x16xf32>
    %103 = vector.extract_strided_slice %83 {offsets = [0, 32], sizes = [2, 16], strides = [1, 1]} : vector<2x48xf32> to vector<2x16xf32>
    %104 = vector.extract_strided_slice %86 {offsets = [0, 32], sizes = [2, 16], strides = [1, 1]} : vector<2x48xf32> to vector<2x16xf32>
    %105 = arith.mulf %94, %104 : vector<2x16xf32>
    %106 = arith.addf %103, %105 : vector<2x16xf32>
    %107 = math.tanh %106 : vector<2x16xf32>
    %cst_30 = arith.constant 1.000000e+00 : f32
    %108 = vector.broadcast %cst_30 : f32 to vector<2x16xf32>
    %109 = arith.subf %108, %102 : vector<2x16xf32>
    %110 = arith.mulf %109, %107 : vector<2x16xf32>
    %111 = arith.mulf %102, %77 : vector<2x16xf32>
    %112 = arith.addf %110, %111 : vector<2x16xf32>
    %c3_i32 = arith.constant 3 : i32
    %113 = arith.index_cast %c3_i32 : i32 to index
    %c0_31 = arith.constant 0 : index
    %c0_32 = arith.constant 0 : index
    %114 = vector.load %arg1[%113, %c0_31, %c0_32] : memref<8x2x4xf32, #tpu.memory_space<vmem>>, vector<1x2x4xf32>
    %115 = vector.shape_cast %114 : vector<1x2x4xf32> to vector<2x4xf32>
    %cst_33 = arith.constant dense<0.000000e+00> : vector<2x48xf32>
    %116 = tpu.matmul %115, %3, %cst_33 {dimension_numbers = #tpu.dot_dimension_numbers<[1], [0], [0], [1], [0, 0, 1, 1], [], []>} : vector<2x4xf32>, vector<4x48xf32>, vector<2x48xf32> -> vector<2x48xf32>
    %117 = vector.broadcast %5 : vector<1x48xf32> to vector<2x48xf32>
    %118 = arith.addf %116, %117 : vector<2x48xf32>
    %cst_34 = arith.constant dense<0.000000e+00> : vector<2x48xf32>
    %119 = tpu.matmul %112, %4, %cst_34 {dimension_numbers = #tpu.dot_dimension_numbers<[1], [0], [0], [1], [0, 0, 1, 1], [], []>} : vector<2x16xf32>, vector<16x48xf32>, vector<2x48xf32> -> vector<2x48xf32>
    %120 = vector.broadcast %6 : vector<1x48xf32> to vector<2x48xf32>
    %121 = arith.addf %119, %120 : vector<2x48xf32>
    %122 = vector.extract_strided_slice %118 {offsets = [0, 0], sizes = [2, 16], strides = [1, 1]} : vector<2x48xf32> to vector<2x16xf32>
    %123 = vector.extract_strided_slice %121 {offsets = [0, 0], sizes = [2, 16], strides = [1, 1]} : vector<2x48xf32> to vector<2x16xf32>
    %124 = arith.addf %122, %123 : vector<2x16xf32>
    %125 = arith.negf %124 : vector<2x16xf32>
    %126 = math.exp %125 : vector<2x16xf32>
    %cst_35 = arith.constant 1.000000e+00 : f32
    %127 = vector.broadcast %cst_35 : f32 to vector<2x16xf32>
    %128 = arith.addf %127, %126 : vector<2x16xf32>
    %129 = arith.divf %127, %128 : vector<2x16xf32>
    %130 = vector.extract_strided_slice %118 {offsets = [0, 16], sizes = [2, 16], strides = [1, 1]} : vector<2x48xf32> to vector<2x16xf32>
    %131 = vector.extract_strided_slice %121 {offsets = [0, 16], sizes = [2, 16], strides = [1, 1]} : vector<2x48xf32> to vector<2x16xf32>
    %132 = arith.addf %130, %131 : vector<2x16xf32>
    %133 = arith.negf %132 : vector<2x16xf32>
    %134 = math.exp %133 : vector<2x16xf32>
    %cst_36 = arith.constant 1.000000e+00 : f32
    %135 = vector.broadcast %cst_36 : f32 to vector<2x16xf32>
    %136 = arith.addf %135, %134 : vector<2x16xf32>
    %137 = arith.divf %135, %136 : vector<2x16xf32>
    %138 = vector.extract_strided_slice %118 {offsets = [0, 32], sizes = [2, 16], strides = [1, 1]} : vector<2x48xf32> to vector<2x16xf32>
    %139 = vector.extract_strided_slice %121 {offsets = [0, 32], sizes = [2, 16], strides = [1, 1]} : vector<2x48xf32> to vector<2x16xf32>
    %140 = arith.mulf %129, %139 : vector<2x16xf32>
    %141 = arith.addf %138, %140 : vector<2x16xf32>
    %142 = math.tanh %141 : vector<2x16xf32>
    %cst_37 = arith.constant 1.000000e+00 : f32
    %143 = vector.broadcast %cst_37 : f32 to vector<2x16xf32>
    %144 = arith.subf %143, %137 : vector<2x16xf32>
    %145 = arith.mulf %144, %142 : vector<2x16xf32>
    %146 = arith.mulf %137, %112 : vector<2x16xf32>
    %147 = arith.addf %145, %146 : vector<2x16xf32>
    %c4_i32 = arith.constant 4 : i32
    %148 = arith.index_cast %c4_i32 : i32 to index
    %c0_38 = arith.constant 0 : index
    %c0_39 = arith.constant 0 : index
    %149 = vector.load %arg1[%148, %c0_38, %c0_39] : memref<8x2x4xf32, #tpu.memory_space<vmem>>, vector<1x2x4xf32>
    %150 = vector.shape_cast %149 : vector<1x2x4xf32> to vector<2x4xf32>
    %cst_40 = arith.constant dense<0.000000e+00> : vector<2x48xf32>
    %151 = tpu.matmul %150, %3, %cst_40 {dimension_numbers = #tpu.dot_dimension_numbers<[1], [0], [0], [1], [0, 0, 1, 1], [], []>} : vector<2x4xf32>, vector<4x48xf32>, vector<2x48xf32> -> vector<2x48xf32>
    %152 = vector.broadcast %5 : vector<1x48xf32> to vector<2x48xf32>
    %153 = arith.addf %151, %152 : vector<2x48xf32>
    %cst_41 = arith.constant dense<0.000000e+00> : vector<2x48xf32>
    %154 = tpu.matmul %147, %4, %cst_41 {dimension_numbers = #tpu.dot_dimension_numbers<[1], [0], [0], [1], [0, 0, 1, 1], [], []>} : vector<2x16xf32>, vector<16x48xf32>, vector<2x48xf32> -> vector<2x48xf32>
    %155 = vector.broadcast %6 : vector<1x48xf32> to vector<2x48xf32>
    %156 = arith.addf %154, %155 : vector<2x48xf32>
    %157 = vector.extract_strided_slice %153 {offsets = [0, 0], sizes = [2, 16], strides = [1, 1]} : vector<2x48xf32> to vector<2x16xf32>
    %158 = vector.extract_strided_slice %156 {offsets = [0, 0], sizes = [2, 16], strides = [1, 1]} : vector<2x48xf32> to vector<2x16xf32>
    %159 = arith.addf %157, %158 : vector<2x16xf32>
    %160 = arith.negf %159 : vector<2x16xf32>
    %161 = math.exp %160 : vector<2x16xf32>
    %cst_42 = arith.constant 1.000000e+00 : f32
    %162 = vector.broadcast %cst_42 : f32 to vector<2x16xf32>
    %163 = arith.addf %162, %161 : vector<2x16xf32>
    %164 = arith.divf %162, %163 : vector<2x16xf32>
    %165 = vector.extract_strided_slice %153 {offsets = [0, 16], sizes = [2, 16], strides = [1, 1]} : vector<2x48xf32> to vector<2x16xf32>
    %166 = vector.extract_strided_slice %156 {offsets = [0, 16], sizes = [2, 16], strides = [1, 1]} : vector<2x48xf32> to vector<2x16xf32>
    %167 = arith.addf %165, %166 : vector<2x16xf32>
    %168 = arith.negf %167 : vector<2x16xf32>
    %169 = math.exp %168 : vector<2x16xf32>
    %cst_43 = arith.constant 1.000000e+00 : f32
    %170 = vector.broadcast %cst_43 : f32 to vector<2x16xf32>
    %171 = arith.addf %170, %169 : vector<2x16xf32>
    %172 = arith.divf %170, %171 : vector<2x16xf32>
    %173 = vector.extract_strided_slice %153 {offsets = [0, 32], sizes = [2, 16], strides = [1, 1]} : vector<2x48xf32> to vector<2x16xf32>
    %174 = vector.extract_strided_slice %156 {offsets = [0, 32], sizes = [2, 16], strides = [1, 1]} : vector<2x48xf32> to vector<2x16xf32>
    %175 = arith.mulf %164, %174 : vector<2x16xf32>
    %176 = arith.addf %173, %175 : vector<2x16xf32>
    %177 = math.tanh %176 : vector<2x16xf32>
    %cst_44 = arith.constant 1.000000e+00 : f32
    %178 = vector.broadcast %cst_44 : f32 to vector<2x16xf32>
    %179 = arith.subf %178, %172 : vector<2x16xf32>
    %180 = arith.mulf %179, %177 : vector<2x16xf32>
    %181 = arith.mulf %172, %147 : vector<2x16xf32>
    %182 = arith.addf %180, %181 : vector<2x16xf32>
    %c5_i32 = arith.constant 5 : i32
    %183 = arith.index_cast %c5_i32 : i32 to index
    %c0_45 = arith.constant 0 : index
    %c0_46 = arith.constant 0 : index
    %184 = vector.load %arg1[%183, %c0_45, %c0_46] : memref<8x2x4xf32, #tpu.memory_space<vmem>>, vector<1x2x4xf32>
    %185 = vector.shape_cast %184 : vector<1x2x4xf32> to vector<2x4xf32>
    %cst_47 = arith.constant dense<0.000000e+00> : vector<2x48xf32>
    %186 = tpu.matmul %185, %3, %cst_47 {dimension_numbers = #tpu.dot_dimension_numbers<[1], [0], [0], [1], [0, 0, 1, 1], [], []>} : vector<2x4xf32>, vector<4x48xf32>, vector<2x48xf32> -> vector<2x48xf32>
    %187 = vector.broadcast %5 : vector<1x48xf32> to vector<2x48xf32>
    %188 = arith.addf %186, %187 : vector<2x48xf32>
    %cst_48 = arith.constant dense<0.000000e+00> : vector<2x48xf32>
    %189 = tpu.matmul %182, %4, %cst_48 {dimension_numbers = #tpu.dot_dimension_numbers<[1], [0], [0], [1], [0, 0, 1, 1], [], []>} : vector<2x16xf32>, vector<16x48xf32>, vector<2x48xf32> -> vector<2x48xf32>
    %190 = vector.broadcast %6 : vector<1x48xf32> to vector<2x48xf32>
    %191 = arith.addf %189, %190 : vector<2x48xf32>
    %192 = vector.extract_strided_slice %188 {offsets = [0, 0], sizes = [2, 16], strides = [1, 1]} : vector<2x48xf32> to vector<2x16xf32>
    %193 = vector.extract_strided_slice %191 {offsets = [0, 0], sizes = [2, 16], strides = [1, 1]} : vector<2x48xf32> to vector<2x16xf32>
    %194 = arith.addf %192, %193 : vector<2x16xf32>
    %195 = arith.negf %194 : vector<2x16xf32>
    %196 = math.exp %195 : vector<2x16xf32>
    %cst_49 = arith.constant 1.000000e+00 : f32
    %197 = vector.broadcast %cst_49 : f32 to vector<2x16xf32>
    %198 = arith.addf %197, %196 : vector<2x16xf32>
    %199 = arith.divf %197, %198 : vector<2x16xf32>
    %200 = vector.extract_strided_slice %188 {offsets = [0, 16], sizes = [2, 16], strides = [1, 1]} : vector<2x48xf32> to vector<2x16xf32>
    %201 = vector.extract_strided_slice %191 {offsets = [0, 16], sizes = [2, 16], strides = [1, 1]} : vector<2x48xf32> to vector<2x16xf32>
    %202 = arith.addf %200, %201 : vector<2x16xf32>
    %203 = arith.negf %202 : vector<2x16xf32>
    %204 = math.exp %203 : vector<2x16xf32>
    %cst_50 = arith.constant 1.000000e+00 : f32
    %205 = vector.broadcast %cst_50 : f32 to vector<2x16xf32>
    %206 = arith.addf %205, %204 : vector<2x16xf32>
    %207 = arith.divf %205, %206 : vector<2x16xf32>
    %208 = vector.extract_strided_slice %188 {offsets = [0, 32], sizes = [2, 16], strides = [1, 1]} : vector<2x48xf32> to vector<2x16xf32>
    %209 = vector.extract_strided_slice %191 {offsets = [0, 32], sizes = [2, 16], strides = [1, 1]} : vector<2x48xf32> to vector<2x16xf32>
    %210 = arith.mulf %199, %209 : vector<2x16xf32>
    %211 = arith.addf %208, %210 : vector<2x16xf32>
    %212 = math.tanh %211 : vector<2x16xf32>
    %cst_51 = arith.constant 1.000000e+00 : f32
    %213 = vector.broadcast %cst_51 : f32 to vector<2x16xf32>
    %214 = arith.subf %213, %207 : vector<2x16xf32>
    %215 = arith.mulf %214, %212 : vector<2x16xf32>
    %216 = arith.mulf %207, %182 : vector<2x16xf32>
    %217 = arith.addf %215, %216 : vector<2x16xf32>
    %c6_i32 = arith.constant 6 : i32
    %218 = arith.index_cast %c6_i32 : i32 to index
    %c0_52 = arith.constant 0 : index
    %c0_53 = arith.constant 0 : index
    %219 = vector.load %arg1[%218, %c0_52, %c0_53] : memref<8x2x4xf32, #tpu.memory_space<vmem>>, vector<1x2x4xf32>
    %220 = vector.shape_cast %219 : vector<1x2x4xf32> to vector<2x4xf32>
    %cst_54 = arith.constant dense<0.000000e+00> : vector<2x48xf32>
    %221 = tpu.matmul %220, %3, %cst_54 {dimension_numbers = #tpu.dot_dimension_numbers<[1], [0], [0], [1], [0, 0, 1, 1], [], []>} : vector<2x4xf32>, vector<4x48xf32>, vector<2x48xf32> -> vector<2x48xf32>
    %222 = vector.broadcast %5 : vector<1x48xf32> to vector<2x48xf32>
    %223 = arith.addf %221, %222 : vector<2x48xf32>
    %cst_55 = arith.constant dense<0.000000e+00> : vector<2x48xf32>
    %224 = tpu.matmul %217, %4, %cst_55 {dimension_numbers = #tpu.dot_dimension_numbers<[1], [0], [0], [1], [0, 0, 1, 1], [], []>} : vector<2x16xf32>, vector<16x48xf32>, vector<2x48xf32> -> vector<2x48xf32>
    %225 = vector.broadcast %6 : vector<1x48xf32> to vector<2x48xf32>
    %226 = arith.addf %224, %225 : vector<2x48xf32>
    %227 = vector.extract_strided_slice %223 {offsets = [0, 0], sizes = [2, 16], strides = [1, 1]} : vector<2x48xf32> to vector<2x16xf32>
    %228 = vector.extract_strided_slice %226 {offsets = [0, 0], sizes = [2, 16], strides = [1, 1]} : vector<2x48xf32> to vector<2x16xf32>
    %229 = arith.addf %227, %228 : vector<2x16xf32>
    %230 = arith.negf %229 : vector<2x16xf32>
    %231 = math.exp %230 : vector<2x16xf32>
    %cst_56 = arith.constant 1.000000e+00 : f32
    %232 = vector.broadcast %cst_56 : f32 to vector<2x16xf32>
    %233 = arith.addf %232, %231 : vector<2x16xf32>
    %234 = arith.divf %232, %233 : vector<2x16xf32>
    %235 = vector.extract_strided_slice %223 {offsets = [0, 16], sizes = [2, 16], strides = [1, 1]} : vector<2x48xf32> to vector<2x16xf32>
    %236 = vector.extract_strided_slice %226 {offsets = [0, 16], sizes = [2, 16], strides = [1, 1]} : vector<2x48xf32> to vector<2x16xf32>
    %237 = arith.addf %235, %236 : vector<2x16xf32>
    %238 = arith.negf %237 : vector<2x16xf32>
    %239 = math.exp %238 : vector<2x16xf32>
    %cst_57 = arith.constant 1.000000e+00 : f32
    %240 = vector.broadcast %cst_57 : f32 to vector<2x16xf32>
    %241 = arith.addf %240, %239 : vector<2x16xf32>
    %242 = arith.divf %240, %241 : vector<2x16xf32>
    %243 = vector.extract_strided_slice %223 {offsets = [0, 32], sizes = [2, 16], strides = [1, 1]} : vector<2x48xf32> to vector<2x16xf32>
    %244 = vector.extract_strided_slice %226 {offsets = [0, 32], sizes = [2, 16], strides = [1, 1]} : vector<2x48xf32> to vector<2x16xf32>
    %245 = arith.mulf %234, %244 : vector<2x16xf32>
    %246 = arith.addf %243, %245 : vector<2x16xf32>
    %247 = math.tanh %246 : vector<2x16xf32>
    %cst_58 = arith.constant 1.000000e+00 : f32
    %248 = vector.broadcast %cst_58 : f32 to vector<2x16xf32>
    %249 = arith.subf %248, %242 : vector<2x16xf32>
    %250 = arith.mulf %249, %247 : vector<2x16xf32>
    %251 = arith.mulf %242, %217 : vector<2x16xf32>
    %252 = arith.addf %250, %251 : vector<2x16xf32>
    %c7_i32 = arith.constant 7 : i32
    %253 = arith.index_cast %c7_i32 : i32 to index
    %c0_59 = arith.constant 0 : index
    %c0_60 = arith.constant 0 : index
    %254 = vector.load %arg1[%253, %c0_59, %c0_60] : memref<8x2x4xf32, #tpu.memory_space<vmem>>, vector<1x2x4xf32>
    %255 = vector.shape_cast %254 : vector<1x2x4xf32> to vector<2x4xf32>
    %cst_61 = arith.constant dense<0.000000e+00> : vector<2x48xf32>
    %256 = tpu.matmul %255, %3, %cst_61 {dimension_numbers = #tpu.dot_dimension_numbers<[1], [0], [0], [1], [0, 0, 1, 1], [], []>} : vector<2x4xf32>, vector<4x48xf32>, vector<2x48xf32> -> vector<2x48xf32>
    %257 = vector.broadcast %5 : vector<1x48xf32> to vector<2x48xf32>
    %258 = arith.addf %256, %257 : vector<2x48xf32>
    %cst_62 = arith.constant dense<0.000000e+00> : vector<2x48xf32>
    %259 = tpu.matmul %252, %4, %cst_62 {dimension_numbers = #tpu.dot_dimension_numbers<[1], [0], [0], [1], [0, 0, 1, 1], [], []>} : vector<2x16xf32>, vector<16x48xf32>, vector<2x48xf32> -> vector<2x48xf32>
    %260 = vector.broadcast %6 : vector<1x48xf32> to vector<2x48xf32>
    %261 = arith.addf %259, %260 : vector<2x48xf32>
    %262 = vector.extract_strided_slice %258 {offsets = [0, 0], sizes = [2, 16], strides = [1, 1]} : vector<2x48xf32> to vector<2x16xf32>
    %263 = vector.extract_strided_slice %261 {offsets = [0, 0], sizes = [2, 16], strides = [1, 1]} : vector<2x48xf32> to vector<2x16xf32>
    %264 = arith.addf %262, %263 : vector<2x16xf32>
    %265 = arith.negf %264 : vector<2x16xf32>
    %266 = math.exp %265 : vector<2x16xf32>
    %cst_63 = arith.constant 1.000000e+00 : f32
    %267 = vector.broadcast %cst_63 : f32 to vector<2x16xf32>
    %268 = arith.addf %267, %266 : vector<2x16xf32>
    %269 = arith.divf %267, %268 : vector<2x16xf32>
    %270 = vector.extract_strided_slice %258 {offsets = [0, 16], sizes = [2, 16], strides = [1, 1]} : vector<2x48xf32> to vector<2x16xf32>
    %271 = vector.extract_strided_slice %261 {offsets = [0, 16], sizes = [2, 16], strides = [1, 1]} : vector<2x48xf32> to vector<2x16xf32>
    %272 = arith.addf %270, %271 : vector<2x16xf32>
    %273 = arith.negf %272 : vector<2x16xf32>
    %274 = math.exp %273 : vector<2x16xf32>
    %cst_64 = arith.constant 1.000000e+00 : f32
    %275 = vector.broadcast %cst_64 : f32 to vector<2x16xf32>
    %276 = arith.addf %275, %274 : vector<2x16xf32>
    %277 = arith.divf %275, %276 : vector<2x16xf32>
    %278 = vector.extract_strided_slice %258 {offsets = [0, 32], sizes = [2, 16], strides = [1, 1]} : vector<2x48xf32> to vector<2x16xf32>
    %279 = vector.extract_strided_slice %261 {offsets = [0, 32], sizes = [2, 16], strides = [1, 1]} : vector<2x48xf32> to vector<2x16xf32>
    %280 = arith.mulf %269, %279 : vector<2x16xf32>
    %281 = arith.addf %278, %280 : vector<2x16xf32>
    %282 = math.tanh %281 : vector<2x16xf32>
    %cst_65 = arith.constant 1.000000e+00 : f32
    %283 = vector.broadcast %cst_65 : f32 to vector<2x16xf32>
    %284 = arith.subf %283, %277 : vector<2x16xf32>
    %285 = arith.mulf %284, %282 : vector<2x16xf32>
    %286 = arith.mulf %277, %252 : vector<2x16xf32>
    %287 = arith.addf %285, %286 : vector<2x16xf32>
    %c8_i32 = arith.constant 8 : i32
    %c0_66 = arith.constant 0 : index
    %c0_67 = arith.constant 0 : index
    %288 = vector.load %arg11[%c0_66, %c0_67] : memref<2x16xf32, #tpu.memory_space<vmem>>, vector<2x16xf32>
    tpu.vector_store %arg11[%c0_66, %c0_67], %287 {strides = array<i32>} : memref<2x16xf32, #tpu.memory_space<vmem>>, vector<2x16xf32>,
    %c0_i32_68 = arith.constant 0 : i32
    %289 = arith.cmpi eq, %arg0, %c0_i32_68 : i32
    %290 = arith.extui %289 : i1 to i32
    %c0_i32_69 = arith.constant 0 : i32
    %291 = arith.cmpi ne, %290, %c0_i32_69 : i32
    scf.if %291 {
      %c0_70 = arith.constant 0 : index
      %c0_71 = arith.constant 0 : index
      %292 = vector.load %arg6[%c0_70, %c0_71] : memref<16x32xf32, #tpu.memory_space<vmem>>, vector<16x32xf32>
      %cst_72 = arith.constant dense<0.000000e+00> : vector<2x32xf32>
      %293 = tpu.matmul %287, %292, %cst_72 {dimension_numbers = #tpu.dot_dimension_numbers<[1], [0], [0], [1], [0, 0, 1, 1], [], []>} : vector<2x16xf32>, vector<16x32xf32>, vector<2x32xf32> -> vector<2x32xf32>
      %c0_73 = arith.constant 0 : index
      %c0_74 = arith.constant 0 : index
      %294 = vector.load %arg7[%c0_73, %c0_74] : memref<1x32xf32, #tpu.memory_space<vmem>>, vector<1x32xf32>
      %295 = vector.broadcast %294 : vector<1x32xf32> to vector<2x32xf32>
      %296 = arith.addf %293, %295 : vector<2x32xf32>
      %297 = vector.extract_strided_slice %296 {offsets = [0, 0], sizes = [2, 16], strides = [1, 1]} : vector<2x32xf32> to vector<2x16xf32>
      %298 = math.tanh %297 : vector<2x16xf32>
      %299 = vector.extract_strided_slice %296 {offsets = [0, 16], sizes = [2, 16], strides = [1, 1]} : vector<2x32xf32> to vector<2x16xf32>
      %300 = arith.negf %299 : vector<2x16xf32>
      %301 = math.exp %300 : vector<2x16xf32>
      %cst_75 = arith.constant 1.000000e+00 : f32
      %302 = vector.broadcast %cst_75 : f32 to vector<2x16xf32>
      %303 = arith.addf %302, %301 : vector<2x16xf32>
      %304 = arith.divf %302, %303 : vector<2x16xf32>
      %305 = arith.mulf %298, %304 : vector<2x16xf32>
      %c0_76 = arith.constant 0 : index
      %c0_77 = arith.constant 0 : index
      %306 = vector.load %arg8[%c0_76, %c0_77] : memref<16x1xf32, #tpu.memory_space<vmem>>, vector<16x1xf32>
      %cst_78 = arith.constant dense<0.000000e+00> : vector<2x1xf32>
      %307 = tpu.matmul %305, %306, %cst_78 {dimension_numbers = #tpu.dot_dimension_numbers<[1], [0], [0], [1], [0, 0, 1, 1], [], []>} : vector<2x16xf32>, vector<16x1xf32>, vector<2x1xf32> -> vector<2x1xf32>
      %c0_79 = arith.constant 0 : index
      %c0_80 = arith.constant 0 : index
      %308 = vector.load %arg9[%c0_79, %c0_80] : memref<1x1xf32, #tpu.memory_space<vmem>>, vector<1x1xf32>
      %309 = vector.broadcast %308 : vector<1x1xf32> to vector<2x1xf32>
      %310 = arith.addf %307, %309 : vector<2x1xf32>
      %311 = arith.negf %310 : vector<2x1xf32>
      %312 = math.exp %311 : vector<2x1xf32>
      %cst_81 = arith.constant 1.000000e+00 : f32
      %313 = vector.broadcast %cst_81 : f32 to vector<2x1xf32>
      %314 = arith.addf %313, %312 : vector<2x1xf32>
      %315 = arith.divf %313, %314 : vector<2x1xf32>
      %c0_82 = arith.constant 0 : index
      %c0_83 = arith.constant 0 : index
      %316 = vector.load %arg10[%c0_82, %c0_83] : memref<2x1xf32, #tpu.memory_space<vmem>>, vector<2x1xf32>
      tpu.vector_store %arg10[%c0_82, %c0_83], %315 {strides = array<i32>} : memref<2x1xf32, #tpu.memory_space<vmem>>, vector<2x1xf32>,
    } else {
    }
    return
  }
  func.func @transform_0(%arg0: i32) -> (i32, i32, i32) {
    %c0_i32 = arith.constant 0 : i32
    %c0_i32_0 = arith.constant 0 : i32
    %c0_i32_1 = arith.constant 0 : i32
    return %arg0, %c0_i32, %c0_i32_0 : i32, i32, i32
  }
  func.func @transform_1(%arg0: i32) -> (i32, i32) {
    %c0_i32 = arith.constant 0 : i32
    %c0_i32_0 = arith.constant 0 : i32
    %c0_i32_1 = arith.constant 0 : i32
    return %c0_i32, %c0_i32_0 : i32, i32
  }
  func.func @transform_2(%arg0: i32) -> (i32, i32) {
    %c0_i32 = arith.constant 0 : i32
    %c0_i32_0 = arith.constant 0 : i32
    %c0_i32_1 = arith.constant 0 : i32
    return %c0_i32, %c0_i32_0 : i32, i32
  }
  func.func @transform_3(%arg0: i32) -> (i32, i32) {
    %c0_i32 = arith.constant 0 : i32
    %c0_i32_0 = arith.constant 0 : i32
    %c0_i32_1 = arith.constant 0 : i32
    return %c0_i32, %c0_i32_0 : i32, i32
  }
  func.func @transform_4(%arg0: i32) -> (i32, i32) {
    %c0_i32 = arith.constant 0 : i32
    %c0_i32_0 = arith.constant 0 : i32
    %c0_i32_1 = arith.constant 0 : i32
    return %c0_i32, %c0_i32_0 : i32, i32
  }
  func.func @transform_5(%arg0: i32) -> (i32, i32) {
    %c0_i32 = arith.constant 0 : i32
    %c0_i32_0 = arith.constant 0 : i32
    %c0_i32_1 = arith.constant 0 : i32
    return %c0_i32, %c0_i32_0 : i32, i32
  }
  func.func @transform_6(%arg0: i32) -> (i32, i32) {
    %c0_i32 = arith.constant 0 : i32
    %c0_i32_0 = arith.constant 0 : i32
    %c0_i32_1 = arith.constant 0 : i32
    return %c0_i32, %c0_i32_0 : i32, i32
  }
  func.func @transform_7(%arg0: i32) -> (i32, i32) {
    %c0_i32 = arith.constant 0 : i32
    %c0_i32_0 = arith.constant 0 : i32
    %c0_i32_1 = arith.constant 0 : i32
    return %c0_i32, %c0_i32_0 : i32, i32
  }
  func.func @transform_8(%arg0: i32) -> (i32, i32) {
    %c0_i32 = arith.constant 0 : i32
    %c0_i32_0 = arith.constant 0 : i32
    %c0_i32_1 = arith.constant 0 : i32
    return %c0_i32, %c0_i32_0 : i32, i32
  }
  func.func @transform_9(%arg0: i32) -> (i32, i32) {
    %c0_i32 = arith.constant 0 : i32
    %c0_i32_0 = arith.constant 0 : i32
    %c0_i32_1 = arith.constant 0 : i32
    return %c0_i32, %c0_i32_0 : i32, i32
  }
}

</mosaic_0001>

<llo_original>
// kernel: tpu_custom_call.1
$region0: #{tpu_custom_call.1}
  #allocation0 [shape = 'u32[]', space=smem, size = 0x4, offset = 0x4, fixed_abs, tag = 'smem constant byte address 0x4 - core index']
  #allocation1 [shape = 'u32[144,128]{1,0:T(1,128)}', space=vmem, size = 0x12000, scoped, tag = 'internal scratch']
  #allocation2 [shape = 'f32[2,16]{1,0:T(2,128)}', space=vmem, size = 0x400, scoped, tag = 'scratch operand']
  #allocation3 [shape = 'f32[1,1]{1,0:T(1,128)S(1)}', space=vmem, size = 0x200, scoped, tag = 'scoped memory for tpu_custom_call.1']
  %s0 = inlined_call_operand.vmem [shape: f32[8,2,4], index: 0, kind: input, shape index: {}]
  %s1 = inlined_call_operand.vmem [shape: f32[4,48], index: 1, kind: input, shape index: {}]
  %s2 = inlined_call_operand.vmem [shape: f32[16,48], index: 2, kind: input, shape index: {}]
  %s3 = inlined_call_operand.vmem [shape: f32[1,48], index: 3, kind: input, shape index: {}]
  %s4 = inlined_call_operand.vmem [shape: f32[1,48], index: 4, kind: input, shape index: {}]
  %s5 = inlined_call_operand.vmem [shape: f32[16,32], index: 5, kind: input, shape index: {}]
  %s6 = inlined_call_operand.vmem [shape: f32[1,32], index: 6, kind: input, shape index: {}]
  %s7 = inlined_call_operand.vmem [shape: f32[16,1], index: 7, kind: input, shape index: {}]
  %s8 = inlined_call_operand.<no memory space> [shape: f32[1,1], index: 8, kind: input, shape index: {}]
  %s9 = inlined_call_operand.vmem [shape: f32[2,1], index: 9, kind: output, shape index: {}]
  %s10 = sld [smem:[#allocation0]]
  $region54: #{tpu_custom_call.1} parent=0
    _
  %s12 = ssub.s32 1, %s10
  %s13 = scalar_select 0, %s12, %s10
  %v14 = vstv %s8
  %15 = vst [vmem:[#allocation3] sm:$0x1] %v14
  // Predicated region
  $region2: #{tpu_custom_call.1} parent=0 // pred_check
    _
  $region3: #{tpu_custom_call.1} parent=0 // pred_check_branch
    %17 = sbr.rel (0) target = $region5
  $region4: #{tpu_custom_call.1} parent=0 // pred_region
    _
  $region5: #{tpu_custom_call.1} parent=0 // pred_fallthru
    _
  // Predicated region
  $region6: #{tpu_custom_call.1} parent=0 // pred_check
    _
  $region7: #{tpu_custom_call.1} parent=0 // pred_check_branch
    %19 = sbr.rel (0) target = $region9
  $region8: #{tpu_custom_call.1} parent=0 // pred_region
    _
  $region9: #{tpu_custom_call.1} parent=0 // pred_fallthru
    _
  // Predicated region
  $region10: #{tpu_custom_call.1} parent=0 // pred_check
    _
  $region11: #{tpu_custom_call.1} parent=0 // pred_check_branch
    %21 = sbr.rel (0) target = $region13
  $region12: #{tpu_custom_call.1} parent=0 // pred_region
    _
  $region13: #{tpu_custom_call.1} parent=0 // pred_fallthru
    _
  // Predicated region
  $region14: #{tpu_custom_call.1} parent=0 // pred_check
    _
  $region15: #{tpu_custom_call.1} parent=0 // pred_check_branch
    %23 = sbr.rel (0) target = $region17
  $region16: #{tpu_custom_call.1} parent=0 // pred_region
    _
  $region17: #{tpu_custom_call.1} parent=0 // pred_fallthru
    _
  // Predicated region
  $region18: #{tpu_custom_call.1} parent=0 // pred_check
    _
  $region19: #{tpu_custom_call.1} parent=0 // pred_check_branch
    %25 = sbr.rel (0) target = $region21
  $region20: #{tpu_custom_call.1} parent=0 // pred_region
    _
  $region21: #{tpu_custom_call.1} parent=0 // pred_fallthru
    _
  // Predicated region
  $region22: #{tpu_custom_call.1} parent=0 // pred_check
    _
  $region23: #{tpu_custom_call.1} parent=0 // pred_check_branch
    %27 = sbr.rel (0) target = $region25
  $region24: #{tpu_custom_call.1} parent=0 // pred_region
    _
  $region25: #{tpu_custom_call.1} parent=0 // pred_fallthru
    _
  // Predicated region
  $region26: #{tpu_custom_call.1} parent=0 // pred_check
    _
  $region27: #{tpu_custom_call.1} parent=0 // pred_check_branch
    %29 = sbr.rel (0) target = $region29
  $region28: #{tpu_custom_call.1} parent=0 // pred_region
    _
  $region29: #{tpu_custom_call.1} parent=0 // pred_fallthru
    _
  // Predicated region
  $region30: #{tpu_custom_call.1} parent=0 // pred_check
    _
  $region31: #{tpu_custom_call.1} parent=0 // pred_check_branch
    %31 = sbr.rel (0) target = $region33
  $region32: #{tpu_custom_call.1} parent=0 // pred_region
    _
  $region33: #{tpu_custom_call.1} parent=0 // pred_fallthru
    _
  // Predicated region
  $region34: #{tpu_custom_call.1} parent=0 // pred_check
    _
  $region35: #{tpu_custom_call.1} parent=0 // pred_check_branch
    %33 = sbr.rel (0) target = $region37
  $region36: #{tpu_custom_call.1} parent=0 // pred_region
    _
  $region37: #{tpu_custom_call.1} parent=0 // pred_fallthru
    _
  %p34 = scmp.eq.s32.totalorder 0, 0
  // Predicated region
  $region38: #{tpu_custom_call.1} parent=0 // pred_check
    %p35 = pneg %p34
  $region39: #{tpu_custom_call.1} parent=0 // pred_check_branch
    %37 = sbr.rel (%p35) target = $region41
  $region40: #{tpu_custom_call.1} parent=0 // pred_region
    %vm38 = vcmask 123904
    %39 = vst.msk [vmem:[#allocation2] sm:$0x3] %vm38, 0.0
  $region41: #{tpu_custom_call.1} parent=0 // pred_fallthru
    _
  %v40 = vld [vmem:[%s1] sm:$0xf]
  %v41 = vld [vmem:[%s2] sm:$0xff]
  %v42 = vld [vmem:[%s2 + $0x8] sm:$0xff]
  %v43 = vld [vmem:[%s3] sm:$0x1]
  %v44 = vld [vmem:[%s4] sm:$0x1]
  %v45 = vld [vmem:[#allocation2] sm:$0x3]
  %v46 = vld [vmem:[%s0] sm:$0x3]
  %v48 = vlaneseq
  %v49 = vshrl.u32 %v48, 7
  %v50 = vsub.s32 0, %v49
  %v51 = vrot.slane %v43, %v50
  %vm53 = vcmask 31744
  %v55 = vsel %vm53, %v46, 0
  %vm57 = vcmask 1043456
  %v59 = vsel %vm57, %v40, 0
  %61 = vmatprep.subr.mxu0 0.0
  %62 = vmatpush1.msra.mxu0 0.0
  %63 = vmatprep.subr.mxu0 0.0
  %64 = vmatpush1.msra.mxu0 0.0
  %65 = vmatprep.subr.mxu0 0.0
  %66 = vmatpush1.msra.mxu0 0.0
  %67 = vmatprep.subr.mxu0 0.0
  %68 = vmatpush1.msra.mxu0 0.0
  %69 = vmatprep.subr.mxu0 0.0
  %70 = vmatpush1.msra.mxu0 0.0
  %71 = vmatprep.subr.mxu0 0.0
  %72 = vmatpush1.msra.mxu0 0.0
  %73 = vmatprep.subr.mxu0 0.0
  %74 = vmatpush1.msra.mxu0 0.0
  %75 = vmatprep.subr.mxu0 0.0
  %76 = vmatpush1.msra.mxu0 0.0
  %77 = vmatprep.subr.mxu0 0.0
  %78 = vmatpush1.msra.mxu0 0.0
  %79 = vmatprep.subr.mxu0 0.0
  %80 = vmatpush1.msra.mxu0 0.0
  %81 = vmatprep.subr.mxu0 0.0
  %82 = vmatpush1.msra.mxu0 0.0
  %83 = vmatprep.subr.mxu0 0.0
  %84 = vmatpush1.msra.mxu0 0.0
  %85 = vmatprep.subr.mxu0 0.0
  %86 = vmatpush1.msra.mxu0 0.0
  %87 = vmatprep.subr.mxu0 0.0
  %88 = vmatpush1.msra.mxu0 0.0
  %89 = vmatprep.subr.mxu0 0.0
  %90 = vmatpush1.msra.mxu0 0.0
  %91 = vmatprep.subr.mxu0 0.0
  %92 = vmatpush1.msra.mxu0 %v59
  %93 = vmatprep.subr.mxu0 0.0
  %94 = vmatpush2.msra.mxu0 0.0
  %95 = vmatprep.subr.mxu0 0.0
  %96 = vmatpush2.msra.mxu0 0.0
  %97 = vmatprep.subr.mxu0 0.0
  %98 = vmatpush2.msra.mxu0 0.0
  %99 = vmatprep.subr.mxu0 0.0
  %100 = vmatpush2.msra.mxu0 0.0
  %101 = vmatprep.subr.mxu0 0.0
  %102 = vmatpush2.msra.mxu0 0.0
  %103 = vmatprep.subr.mxu0 0.0
  %104 = vmatpush2.msra.mxu0 0.0
  %105 = vmatprep.subr.mxu0 0.0
  %106 = vmatpush2.msra.mxu0 0.0
  %107 = vmatprep.subr.mxu0 0.0
  %108 = vmatpush2.msra.mxu0 0.0
  %109 = vmatprep.subr.mxu0 0.0
  %110 = vmatpush2.msra.mxu0 0.0
  %111 = vmatprep.subr.mxu0 0.0
  %112 = vmatpush2.msra.mxu0 0.0
  %113 = vmatprep.subr.mxu0 0.0
  %114 = vmatpush2.msra.mxu0 0.0
  %115 = vmatprep.subr.mxu0 0.0
  %116 = vmatpush2.msra.mxu0 0.0
  %117 = vmatprep.subr.mxu0 0.0
  %118 = vmatpush2.msra.mxu0 0.0
  %119 = vmatprep.subr.mxu0 0.0
  %120 = vmatpush2.msra.mxu0 0.0
  %121 = vmatprep.subr.mxu0 0.0
  %122 = vmatpush2.msra.mxu0 0.0
  %123 = vmatprep.subr.mxu0 0.0
  %124 = vmatpush2.msra.mxu0 0.0
  %125 = vmatprep.mubr.f32.mxu0 0.0
  %126 = vmatmul.mubr.f32.gmra.mxu0 %v55
  %v127 = vpop.f32.mrf.mxu0
  %v128 = vadd.f32 %v51, %v127
  %v129 = vpop.f32.mrf.mxu0
  %130 = vdwg.mxu0
  %v132 = vlaneseq
  %v133 = vshrl.u32 %v132, 7
  %v134 = vsub.s32 0, %v133
  %v135 = vrot.slane %v44, %v134
  %vm137 = vcmask 130048
  %v139 = vsel %vm137, %v45, 0
  %141 = vmatprep.subr.mxu0 0.0
  %142 = vmatpush1.msra.mxu0 0.0
  %143 = vmatprep.subr.mxu0 0.0
  %144 = vmatpush1.msra.mxu0 0.0
  %145 = vmatprep.subr.mxu0 0.0
  %146 = vmatpush1.msra.mxu0 0.0
  %147 = vmatprep.subr.mxu0 0.0
  %148 = vmatpush1.msra.mxu0 0.0
  %149 = vmatprep.subr.mxu0 0.0
  %150 = vmatpush1.msra.mxu0 0.0
  %151 = vmatprep.subr.mxu0 0.0
  %152 = vmatpush1.msra.mxu0 0.0
  %153 = vmatprep.subr.mxu0 0.0
  %154 = vmatpush1.msra.mxu0 0.0
  %155 = vmatprep.subr.mxu0 0.0
  %156 = vmatpush1.msra.mxu0 0.0
  %157 = vmatprep.subr.mxu0 0.0
  %158 = vmatpush1.msra.mxu0 0.0
  %159 = vmatprep.subr.mxu0 0.0
  %160 = vmatpush1.msra.mxu0 0.0
  %161 = vmatprep.subr.mxu0 0.0
  %162 = vmatpush1.msra.mxu0 0.0
  %163 = vmatprep.subr.mxu0 0.0
  %164 = vmatpush1.msra.mxu0 0.0
  %165 = vmatprep.subr.mxu0 0.0
  %166 = vmatpush1.msra.mxu0 0.0
  %167 = vmatprep.subr.mxu0 0.0
  %168 = vmatpush1.msra.mxu0 0.0
  %169 = vmatprep.subr.mxu0 0.0
  %170 = vmatpush1.msra.mxu0 %v42
  %171 = vmatprep.subr.mxu0 0.0
  %172 = vmatpush1.msra.mxu0 %v41
  %173 = vmatprep.subr.mxu0 0.0
  %174 = vmatpush2.msra.mxu0 0.0
  %175 = vmatprep.subr.mxu0 0.0
  %176 = vmatpush2.msra.mxu0 0.0
  %177 = vmatprep.subr.mxu0 0.0
  %178 = vmatpush2.msra.mxu0 0.0
  %179 = vmatprep.subr.mxu0 0.0
  %180 = vmatpush2.msra.mxu0 0.0
  %181 = vmatprep.subr.mxu0 0.0
  %182 = vmatpush2.msra.mxu0 0.0
  %183 = vmatprep.subr.mxu0 0.0
  %184 = vmatpush2.msra.mxu0 0.0
  %185 = vmatprep.subr.mxu0 0.0
  %186 = vmatpush2.msra.mxu0 0.0
  %187 = vmatprep.subr.mxu0 0.0
  %188 = vmatpush2.msra.mxu0 0.0
  %189 = vmatprep.subr.mxu0 0.0
  %190 = vmatpush2.msra.mxu0 0.0
  %191 = vmatprep.subr.mxu0 0.0
  %192 = vmatpush2.msra.mxu0 0.0
  %193 = vmatprep.subr.mxu0 0.0
  %194 = vmatpush2.msra.mxu0 0.0
  %195 = vmatprep.subr.mxu0 0.0
  %196 = vmatpush2.msra.mxu0 0.0
  %197 = vmatprep.subr.mxu0 0.0
  %198 = vmatpush2.msra.mxu0 0.0
  %199 = vmatprep.subr.mxu0 0.0
  %200 = vmatpush2.msra.mxu0 0.0
  %201 = vmatprep.subr.mxu0 0.0
  %202 = vmatpush2.msra.mxu0 0.0
  %203 = vmatprep.subr.mxu0 0.0
  %204 = vmatpush2.msra.mxu0 0.0
  %205 = vmatprep.mubr.f32.mxu0 0.0
  %206 = vmatmul.mubr.f32.gmra.mxu0 %v139
  %v207 = vpop.f32.mrf.mxu0
  %v208 = vadd.f32 %v135, %v207
  %v209 = vpop.f32.mrf.mxu0
  %210 = vdwg.mxu0
  %v211 = vadd.f32 %v128, %v208
  %v212 = vxor.u32 %v211, 2147483648
  %v213 = vmul.f32 %v212, 1.442695
  %v214 = vpow.pop %v213
  %v215 = vadd.f32 %v214, 1.0
  %v216 = vrcp.pop %v215
  %v217 = vmul.f32 1.0, %v216
  %219 = vrot.lane.b32.xlu0 %v208, 96
  %v220 = vpop.permute.xlu0 %219
  %v222 = vmul.f32 %v217, %v220
  %224 = vrot.lane.b32.xlu0 %v222, 32
  %v225 = vpop.permute.xlu0 %224
  %v227 = vadd.f32 %v128, %v225
  %v228 = vtanh.pop %v227
  %v229 = vsub.f32 1.0, %v217
  %231 = vrot.lane.b32.xlu0 %v228, 112
  %v232 = vpop.permute.xlu0 %231
  %v234 = vmul.f32 %v229, %v232
  %235 = vrot.lane.b32.xlu0 %v45, 16
  %v236 = vpop.permute.xlu0 %235
  %v238 = vmul.f32 %v217, %v236
  %v239 = vadd.f32 %v234, %v238
  %s240 = scalar_lea.vmem %s0, 2
  %v241 = vld [vmem:[%s240] sm:$0x3]
  %v243 = vsel %vm53, %v241, 0
  %245 = vmatprep.subr.mxu0 0.0
  %246 = vmatpush1.msra.mxu0 0.0
  %247 = vmatprep.subr.mxu0 0.0
  %248 = vmatpush1.msra.mxu0 0.0
  %249 = vmatprep.subr.mxu0 0.0
  %250 = vmatpush1.msra.mxu0 0.0
  %251 = vmatprep.subr.mxu0 0.0
  %252 = vmatpush1.msra.mxu0 0.0
  %253 = vmatprep.subr.mxu0 0.0
  %254 = vmatpush1.msra.mxu0 0.0
  %255 = vmatprep.subr.mxu0 0.0
  %256 = vmatpush1.msra.mxu0 0.0
  %257 = vmatprep.subr.mxu0 0.0
  %258 = vmatpush1.msra.mxu0 0.0
  %259 = vmatprep.subr.mxu0 0.0
  %260 = vmatpush1.msra.mxu0 0.0
  %261 = vmatprep.subr.mxu0 0.0
  %262 = vmatpush1.msra.mxu0 0.0
  %263 = vmatprep.subr.mxu0 0.0
  %264 = vmatpush1.msra.mxu0 0.0
  %265 = vmatprep.subr.mxu0 0.0
  %266 = vmatpush1.msra.mxu0 0.0
  %267 = vmatprep.subr.mxu0 0.0
  %268 = vmatpush1.msra.mxu0 0.0
  %269 = vmatprep.subr.mxu0 0.0
  %270 = vmatpush1.msra.mxu0 0.0
  %271 = vmatprep.subr.mxu0 0.0
  %272 = vmatpush1.msra.mxu0 0.0
  %273 = vmatprep.subr.mxu0 0.0
  %274 = vmatpush1.msra.mxu0 0.0
  %275 = vmatprep.subr.mxu0 0.0
  %276 = vmatpush1.msra.mxu0 %v59
  %277 = vmatprep.subr.mxu0 0.0
  %278 = vmatpush2.msra.mxu0 0.0
  %279 = vmatprep.subr.mxu0 0.0
  %280 = vmatpush2.msra.mxu0 0.0
  %281 = vmatprep.subr.mxu0 0.0
  %282 = vmatpush2.msra.mxu0 0.0
  %283 = vmatprep.subr.mxu0 0.0
  %284 = vmatpush2.msra.mxu0 0.0
  %285 = vmatprep.subr.mxu0 0.0
  %286 = vmatpush2.msra.mxu0 0.0
  %287 = vmatprep.subr.mxu0 0.0
  %288 = vmatpush2.msra.mxu0 0.0
  %289 = vmatprep.subr.mxu0 0.0
  %290 = vmatpush2.msra.mxu0 0.0
  %291 = vmatprep.subr.mxu0 0.0
  %292 = vmatpush2.msra.mxu0 0.0
  %293 = vmatprep.subr.mxu0 0.0
  %294 = vmatpush2.msra.mxu0 0.0
  %295 = vmatprep.subr.mxu0 0.0
  %296 = vmatpush2.msra.mxu0 0.0
  %297 = vmatprep.subr.mxu0 0.0
  %298 = vmatpush2.msra.mxu0 0.0
  %299 = vmatprep.subr.mxu0 0.0
  %300 = vmatpush2.msra.mxu0 0.0
  %301 = vmatprep.subr.mxu0 0.0
  %302 = vmatpush2.msra.mxu0 0.0
  %303 = vmatprep.subr.mxu0 0.0
  %304 = vmatpush2.msra.mxu0 0.0
  %305 = vmatprep.subr.mxu0 0.0
  %306 = vmatpush2.msra.mxu0 0.0
  %307 = vmatprep.subr.mxu0 0.0
  %308 = vmatpush2.msra.mxu0 0.0
  %309 = vmatprep.mubr.f32.mxu0 0.0
  %310 = vmatmul.mubr.f32.gmra.mxu0 %v243
  %v311 = vpop.f32.mrf.mxu0
  %v312 = vadd.f32 %v51, %v311
  %v313 = vpop.f32.mrf.mxu0
  %314 = vdwg.mxu0
  %316 = vrot.lane.b32.xlu0 %v239, 112
  %v317 = vpop.permute.xlu0 %316
  %v318 = vsel %vm137, %v317, 0
  %320 = vmatprep.subr.mxu0 0.0
  %321 = vmatpush1.msra.mxu0 0.0
  %322 = vmatprep.subr.mxu0 0.0
  %323 = vmatpush1.msra.mxu0 0.0
  %324 = vmatprep.subr.mxu0 0.0
  %325 = vmatpush1.msra.mxu0 0.0
  %326 = vmatprep.subr.mxu0 0.0
  %327 = vmatpush1.msra.mxu0 0.0
  %328 = vmatprep.subr.mxu0 0.0
  %329 = vmatpush1.msra.mxu0 0.0
  %330 = vmatprep.subr.mxu0 0.0
  %331 = vmatpush1.msra.mxu0 0.0
  %332 = vmatprep.subr.mxu0 0.0
  %333 = vmatpush1.msra.mxu0 0.0
  %334 = vmatprep.subr.mxu0 0.0
  %335 = vmatpush1.msra.mxu0 0.0
  %336 = vmatprep.subr.mxu0 0.0
  %337 = vmatpush1.msra.mxu0 0.0
  %338 = vmatprep.subr.mxu0 0.0
  %339 = vmatpush1.msra.mxu0 0.0
  %340 = vmatprep.subr.mxu0 0.0
  %341 = vmatpush1.msra.mxu0 0.0
  %342 = vmatprep.subr.mxu0 0.0
  %343 = vmatpush1.msra.mxu0 0.0
  %344 = vmatprep.subr.mxu0 0.0
  %345 = vmatpush1.msra.mxu0 0.0
  %346 = vmatprep.subr.mxu0 0.0
  %347 = vmatpush1.msra.mxu0 0.0
  %348 = vmatprep.subr.mxu0 0.0
  %349 = vmatpush1.msra.mxu0 %v42
  %350 = vmatprep.subr.mxu0 0.0
  %351 = vmatpush1.msra.mxu0 %v41
  %352 = vmatprep.subr.mxu0 0.0
  %353 = vmatpush2.msra.mxu0 0.0
  %354 = vmatprep.subr.mxu0 0.0
  %355 = vmatpush2.msra.mxu0 0.0
  %356 = vmatprep.subr.mxu0 0.0
  %357 = vmatpush2.msra.mxu0 0.0
  %358 = vmatprep.subr.mxu0 0.0
  %359 = vmatpush2.msra.mxu0 0.0
  %360 = vmatprep.subr.mxu0 0.0
  %361 = vmatpush2.msra.mxu0 0.0
  %362 = vmatprep.subr.mxu0 0.0
  %363 = vmatpush2.msra.mxu0 0.0
  %364 = vmatprep.subr.mxu0 0.0
  %365 = vmatpush2.msra.mxu0 0.0
  %366 = vmatprep.subr.mxu0 0.0
  %367 = vmatpush2.msra.mxu0 0.0
  %368 = vmatprep.subr.mxu0 0.0
  %369 = vmatpush2.msra.mxu0 0.0
  %370 = vmatprep.subr.mxu0 0.0
  %371 = vmatpush2.msra.mxu0 0.0
  %372 = vmatprep.subr.mxu0 0.0
  %373 = vmatpush2.msra.mxu0 0.0
  %374 = vmatprep.subr.mxu0 0.0
  %375 = vmatpush2.msra.mxu0 0.0
  %376 = vmatprep.subr.mxu0 0.0
  %377 = vmatpush2.msra.mxu0 0.0
  %378 = vmatprep.subr.mxu0 0.0
  %379 = vmatpush2.msra.mxu0 0.0
  %380 = vmatprep.subr.mxu0 0.0
  %381 = vmatpush2.msra.mxu0 0.0
  %382 = vmatprep.subr.mxu0 0.0
  %383 = vmatpush2.msra.mxu0 0.0
  %384 = vmatprep.mubr.f32.mxu0 0.0
  %385 = vmatmul.mubr.f32.gmra.mxu0 %v318
  %v386 = vpop.f32.mrf.mxu0
  %v387 = vadd.f32 %v135, %v386
  %v388 = vpop.f32.mrf.mxu0
  %389 = vdwg.mxu0
  %v390 = vadd.f32 %v312, %v387
  %v391 = vxor.u32 %v390, 2147483648
  %v392 = vmul.f32 %v391, 1.442695
  %v393 = vpow.pop %v392
  %v394 = vadd.f32 %v393, 1.0
  %v395 = vrcp.pop %v394
  %v396 = vmul.f32 1.0, %v395
  %398 = vrot.lane.b32.xlu0 %v387, 96
  %v399 = vpop.permute.xlu0 %398
  %v401 = vmul.f32 %v396, %v399
  %403 = vrot.lane.b32.xlu0 %v401, 32
  %v404 = vpop.permute.xlu0 %403
  %v406 = vadd.f32 %v312, %v404
  %v407 = vtanh.pop %v406
  %v408 = vsub.f32 1.0, %v396
  %410 = vrot.lane.b32.xlu0 %v407, 112
  %v411 = vpop.permute.xlu0 %410
  %v413 = vmul.f32 %v408, %v411
  %v414 = vmul.f32 %v396, %v239
  %v415 = vadd.f32 %v413, %v414
  %s416 = scalar_lea.vmem %s0, 4
  %v417 = vld [vmem:[%s416] sm:$0x3]
  %v419 = vsel %vm53, %v417, 0
  %421 = vmatprep.subr.mxu0 0.0
  %422 = vmatpush1.msra.mxu0 0.0
  %423 = vmatprep.subr.mxu0 0.0
  %424 = vmatpush1.msra.mxu0 0.0
  %425 = vmatprep.subr.mxu0 0.0
  %426 = vmatpush1.msra.mxu0 0.0
  %427 = vmatprep.subr.mxu0 0.0
  %428 = vmatpush1.msra.mxu0 0.0
  %429 = vmatprep.subr.mxu0 0.0
  %430 = vmatpush1.msra.mxu0 0.0
  %431 = vmatprep.subr.mxu0 0.0
  %432 = vmatpush1.msra.mxu0 0.0
  %433 = vmatprep.subr.mxu0 0.0
  %434 = vmatpush1.msra.mxu0 0.0
  %435 = vmatprep.subr.mxu0 0.0
  %436 = vmatpush1.msra.mxu0 0.0
  %437 = vmatprep.subr.mxu0 0.0
  %438 = vmatpush1.msra.mxu0 0.0
  %439 = vmatprep.subr.mxu0 0.0
  %440 = vmatpush1.msra.mxu0 0.0
  %441 = vmatprep.subr.mxu0 0.0
  %442 = vmatpush1.msra.mxu0 0.0
  %443 = vmatprep.subr.mxu0 0.0
  %444 = vmatpush1.msra.mxu0 0.0
  %445 = vmatprep.subr.mxu0 0.0
  %446 = vmatpush1.msra.mxu0 0.0
  %447 = vmatprep.subr.mxu0 0.0
  %448 = vmatpush1.msra.mxu0 0.0
  %449 = vmatprep.subr.mxu0 0.0
  %450 = vmatpush1.msra.mxu0 0.0
  %451 = vmatprep.subr.mxu0 0.0
  %452 = vmatpush1.msra.mxu0 %v59
  %453 = vmatprep.subr.mxu0 0.0
  %454 = vmatpush2.msra.mxu0 0.0
  %455 = vmatprep.subr.mxu0 0.0
  %456 = vmatpush2.msra.mxu0 0.0
  %457 = vmatprep.subr.mxu0 0.0
  %458 = vmatpush2.msra.mxu0 0.0
  %459 = vmatprep.subr.mxu0 0.0
  %460 = vmatpush2.msra.mxu0 0.0
  %461 = vmatprep.subr.mxu0 0.0
  %462 = vmatpush2.msra.mxu0 0.0
  %463 = vmatprep.subr.mxu0 0.0
  %464 = vmatpush2.msra.mxu0 0.0
  %465 = vmatprep.subr.mxu0 0.0
  %466 = vmatpush2.msra.mxu0 0.0
  %467 = vmatprep.subr.mxu0 0.0
  %468 = vmatpush2.msra.mxu0 0.0
  %469 = vmatprep.subr.mxu0 0.0
  %470 = vmatpush2.msra.mxu0 0.0
  %471 = vmatprep.subr.mxu0 0.0
  %472 = vmatpush2.msra.mxu0 0.0
  %473 = vmatprep.subr.mxu0 0.0
  %474 = vmatpush2.msra.mxu0 0.0
  %475 = vmatprep.subr.mxu0 0.0
  %476 = vmatpush2.msra.mxu0 0.0
  %477 = vmatprep.subr.mxu0 0.0
  %478 = vmatpush2.msra.mxu0 0.0
  %479 = vmatprep.subr.mxu0 0.0
  %480 = vmatpush2.msra.mxu0 0.0
  %481 = vmatprep.subr.mxu0 0.0
  %482 = vmatpush2.msra.mxu0 0.0
  %483 = vmatprep.subr.mxu0 0.0
  %484 = vmatpush2.msra.mxu0 0.0
  %485 = vmatprep.mubr.f32.mxu0 0.0
  %486 = vmatmul.mubr.f32.gmra.mxu0 %v419
  %v487 = vpop.f32.mrf.mxu0
  %v488 = vadd.f32 %v51, %v487
  %v489 = vpop.f32.mrf.mxu0
  %490 = vdwg.mxu0
  %492 = vrot.lane.b32.xlu0 %v415, 112
  %v493 = vpop.permute.xlu0 %492
  %v494 = vsel %vm137, %v493, 0
  %496 = vmatprep.subr.mxu0 0.0
  %497 = vmatpush1.msra.mxu0 0.0
  %498 = vmatprep.subr.mxu0 0.0
  %499 = vmatpush1.msra.mxu0 0.0
  %500 = vmatprep.subr.mxu0 0.0
  %501 = vmatpush1.msra.mxu0 0.0
  %502 = vmatprep.subr.mxu0 0.0
  %503 = vmatpush1.msra.mxu0 0.0
  %504 = vmatprep.subr.mxu0 0.0
  %505 = vmatpush1.msra.mxu0 0.0
  %506 = vmatprep.subr.mxu0 0.0
  %507 = vmatpush1.msra.mxu0 0.0
  %508 = vmatprep.subr.mxu0 0.0
  %509 = vmatpush1.msra.mxu0 0.0
  %510 = vmatprep.subr.mxu0 0.0
  %511 = vmatpush1.msra.mxu0 0.0
  %512 = vmatprep.subr.mxu0 0.0
  %513 = vmatpush1.msra.mxu0 0.0
  %514 = vmatprep.subr.mxu0 0.0
  %515 = vmatpush1.msra.mxu0 0.0
  %516 = vmatprep.subr.mxu0 0.0
  %517 = vmatpush1.msra.mxu0 0.0
  %518 = vmatprep.subr.mxu0 0.0
  %519 = vmatpush1.msra.mxu0 0.0
  %520 = vmatprep.subr.mxu0 0.0
  %521 = vmatpush1.msra.mxu0 0.0
  %522 = vmatprep.subr.mxu0 0.0
  %523 = vmatpush1.msra.mxu0 0.0
  %524 = vmatprep.subr.mxu0 0.0
  %525 = vmatpush1.msra.mxu0 %v42
  %526 = vmatprep.subr.mxu0 0.0
  %527 = vmatpush1.msra.mxu0 %v41
  %528 = vmatprep.subr.mxu0 0.0
  %529 = vmatpush2.msra.mxu0 0.0
  %530 = vmatprep.subr.mxu0 0.0
  %531 = vmatpush2.msra.mxu0 0.0
  %532 = vmatprep.subr.mxu0 0.0
  %533 = vmatpush2.msra.mxu0 0.0
  %534 = vmatprep.subr.mxu0 0.0
  %535 = vmatpush2.msra.mxu0 0.0
  %536 = vmatprep.subr.mxu0 0.0
  %537 = vmatpush2.msra.mxu0 0.0
  %538 = vmatprep.subr.mxu0 0.0
  %539 = vmatpush2.msra.mxu0 0.0
  %540 = vmatprep.subr.mxu0 0.0
  %541 = vmatpush2.msra.mxu0 0.0
  %542 = vmatprep.subr.mxu0 0.0
  %543 = vmatpush2.msra.mxu0 0.0
  %544 = vmatprep.subr.mxu0 0.0
  %545 = vmatpush2.msra.mxu0 0.0
  %546 = vmatprep.subr.mxu0 0.0
  %547 = vmatpush2.msra.mxu0 0.0
  %548 = vmatprep.subr.mxu0 0.0
  %549 = vmatpush2.msra.mxu0 0.0
  %550 = vmatprep.subr.mxu0 0.0
  %551 = vmatpush2.msra.mxu0 0.0
  %552 = vmatprep.subr.mxu0 0.0
  %553 = vmatpush2.msra.mxu0 0.0
  %554 = vmatprep.subr.mxu0 0.0
  %555 = vmatpush2.msra.mxu0 0.0
  %556 = vmatprep.subr.mxu0 0.0
  %557 = vmatpush2.msra.mxu0 0.0
  %558 = vmatprep.subr.mxu0 0.0
  %559 = vmatpush2.msra.mxu0 0.0
  %560 = vmatprep.mubr.f32.mxu0 0.0
  %561 = vmatmul.mubr.f32.gmra.mxu0 %v494
  %v562 = vpop.f32.mrf.mxu0
  %v563 = vadd.f32 %v135, %v562
  %v564 = vpop.f32.mrf.mxu0
  %565 = vdwg.mxu0
  %v566 = vadd.f32 %v488, %v563
  %v567 = vxor.u32 %v566, 2147483648
  %v568 = vmul.f32 %v567, 1.442695
  %v569 = vpow.pop %v568
  %v570 = vadd.f32 %v569, 1.0
  %v571 = vrcp.pop %v570
  %v572 = vmul.f32 1.0, %v571
  %574 = vrot.lane.b32.xlu0 %v563, 96
  %v575 = vpop.permute.xlu0 %574
  %v577 = vmul.f32 %v572, %v575
  %579 = vrot.lane.b32.xlu0 %v577, 32
  %v580 = vpop.permute.xlu0 %579
  %v582 = vadd.f32 %v488, %v580
  %v583 = vtanh.pop %v582
  %v584 = vsub.f32 1.0, %v572
  %586 = vrot.lane.b32.xlu0 %v583, 112
  %v587 = vpop.permute.xlu0 %586
  %v589 = vmul.f32 %v584, %v587
  %v590 = vmul.f32 %v572, %v415
  %v591 = vadd.f32 %v589, %v590
  %s592 = scalar_lea.vmem %s0, 6
  %v593 = vld [vmem:[%s592] sm:$0x3]
  %v595 = vsel %vm53, %v593, 0
  %597 = vmatprep.subr.mxu0 0.0
  %598 = vmatpush1.msra.mxu0 0.0
  %599 = vmatprep.subr.mxu0 0.0
  %600 = vmatpush1.msra.mxu0 0.0
  %601 = vmatprep.subr.mxu0 0.0
  %602 = vmatpush1.msra.mxu0 0.0
  %603 = vmatprep.subr.mxu0 0.0
  %604 = vmatpush1.msra.mxu0 0.0
  %605 = vmatprep.subr.mxu0 0.0
  %606 = vmatpush1.msra.mxu0 0.0
  %607 = vmatprep.subr.mxu0 0.0
  %608 = vmatpush1.msra.mxu0 0.0
  %609 = vmatprep.subr.mxu0 0.0
  %610 = vmatpush1.msra.mxu0 0.0
  %611 = vmatprep.subr.mxu0 0.0
  %612 = vmatpush1.msra.mxu0 0.0
  %613 = vmatprep.subr.mxu0 0.0
  %614 = vmatpush1.msra.mxu0 0.0
  %615 = vmatprep.subr.mxu0 0.0
  %616 = vmatpush1.msra.mxu0 0.0
  %617 = vmatprep.subr.mxu0 0.0
  %618 = vmatpush1.msra.mxu0 0.0
  %619 = vmatprep.subr.mxu0 0.0
  %620 = vmatpush1.msra.mxu0 0.0
  %621 = vmatprep.subr.mxu0 0.0
  %622 = vmatpush1.msra.mxu0 0.0
  %623 = vmatprep.subr.mxu0 0.0
  %624 = vmatpush1.msra.mxu0 0.0
  %625 = vmatprep.subr.mxu0 0.0
  %626 = vmatpush1.msra.mxu0 0.0
  %627 = vmatprep.subr.mxu0 0.0
  %628 = vmatpush1.msra.mxu0 %v59
  %629 = vmatprep.subr.mxu0 0.0
  %630 = vmatpush2.msra.mxu0 0.0
  %631 = vmatprep.subr.mxu0 0.0
  %632 = vmatpush2.msra.mxu0 0.0
  %633 = vmatprep.subr.mxu0 0.0
  %634 = vmatpush2.msra.mxu0 0.0
  %635 = vmatprep.subr.mxu0 0.0
  %636 = vmatpush2.msra.mxu0 0.0
  %637 = vmatprep.subr.mxu0 0.0
  %638 = vmatpush2.msra.mxu0 0.0
  %639 = vmatprep.subr.mxu0 0.0
  %640 = vmatpush2.msra.mxu0 0.0
  %641 = vmatprep.subr.mxu0 0.0
  %642 = vmatpush2.msra.mxu0 0.0
  %643 = vmatprep.subr.mxu0 0.0
  %644 = vmatpush2.msra.mxu0 0.0
  %645 = vmatprep.subr.mxu0 0.0
  %646 = vmatpush2.msra.mxu0 0.0
  %647 = vmatprep.subr.mxu0 0.0
  %648 = vmatpush2.msra.mxu0 0.0
  %649 = vmatprep.subr.mxu0 0.0
  %650 = vmatpush2.msra.mxu0 0.0
  %651 = vmatprep.subr.mxu0 0.0
  %652 = vmatpush2.msra.mxu0 0.0
  %653 = vmatprep.subr.mxu0 0.0
  %654 = vmatpush2.msra.mxu0 0.0
  %655 = vmatprep.subr.mxu0 0.0
  %656 = vmatpush2.msra.mxu0 0.0
  %657 = vmatprep.subr.mxu0 0.0
  %658 = vmatpush2.msra.mxu0 0.0
  %659 = vmatprep.subr.mxu0 0.0
  %660 = vmatpush2.msra.mxu0 0.0
  %661 = vmatprep.mubr.f32.mxu0 0.0
  %662 = vmatmul.mubr.f32.gmra.mxu0 %v595
  %v663 = vpop.f32.mrf.mxu0
  %v664 = vadd.f32 %v51, %v663
  %v665 = vpop.f32.mrf.mxu0
  %666 = vdwg.mxu0
  %668 = vrot.lane.b32.xlu0 %v591, 112
  %v669 = vpop.permute.xlu0 %668
  %v670 = vsel %vm137, %v669, 0
  %672 = vmatprep.subr.mxu0 0.0
  %673 = vmatpush1.msra.mxu0 0.0
  %674 = vmatprep.subr.mxu0 0.0
  %675 = vmatpush1.msra.mxu0 0.0
  %676 = vmatprep.subr.mxu0 0.0
  %677 = vmatpush1.msra.mxu0 0.0
  %678 = vmatprep.subr.mxu0 0.0
  %679 = vmatpush1.msra.mxu0 0.0
  %680 = vmatprep.subr.mxu0 0.0
  %681 = vmatpush1.msra.mxu0 0.0
  %682 = vmatprep.subr.mxu0 0.0
  %683 = vmatpush1.msra.mxu0 0.0
  %684 = vmatprep.subr.mxu0 0.0
  %685 = vmatpush1.msra.mxu0 0.0
  %686 = vmatprep.subr.mxu0 0.0
  %687 = vmatpush1.msra.mxu0 0.0
  %688 = vmatprep.subr.mxu0 0.0
  %689 = vmatpush1.msra.mxu0 0.0
  %690 = vmatprep.subr.mxu0 0.0
  %691 = vmatpush1.msra.mxu0 0.0
  %692 = vmatprep.subr.mxu0 0.0
  %693 = vmatpush1.msra.mxu0 0.0
  %694 = vmatprep.subr.mxu0 0.0
  %695 = vmatpush1.msra.mxu0 0.0
  %696 = vmatprep.subr.mxu0 0.0
  %697 = vmatpush1.msra.mxu0 0.0
  %698 = vmatprep.subr.mxu0 0.0
  %699 = vmatpush1.msra.mxu0 0.0
  %700 = vmatprep.subr.mxu0 0.0
  %701 = vmatpush1.msra.mxu0 %v42
  %702 = vmatprep.subr.mxu0 0.0
  %703 = vmatpush1.msra.mxu0 %v41
  %704 = vmatprep.subr.mxu0 0.0
  %705 = vmatpush2.msra.mxu0 0.0
  %706 = vmatprep.subr.mxu0 0.0
  %707 = vmatpush2.msra.mxu0 0.0
  %708 = vmatprep.subr.mxu0 0.0
  %709 = vmatpush2.msra.mxu0 0.0
  %710 = vmatprep.subr.mxu0 0.0
  %711 = vmatpush2.msra.mxu0 0.0
  %712 = vmatprep.subr.mxu0 0.0
  %713 = vmatpush2.msra.mxu0 0.0
  %714 = vmatprep.subr.mxu0 0.0
  %715 = vmatpush2.msra.mxu0 0.0
  %716 = vmatprep.subr.mxu0 0.0
  %717 = vmatpush2.msra.mxu0 0.0
  %718 = vmatprep.subr.mxu0 0.0
  %719 = vmatpush2.msra.mxu0 0.0
  %720 = vmatprep.subr.mxu0 0.0
  %721 = vmatpush2.msra.mxu0 0.0
  %722 = vmatprep.subr.mxu0 0.0
  %723 = vmatpush2.msra.mxu0 0.0
  %724 = vmatprep.subr.mxu0 0.0
  %725 = vmatpush2.msra.mxu0 0.0
  %726 = vmatprep.subr.mxu0 0.0
  %727 = vmatpush2.msra.mxu0 0.0
  %728 = vmatprep.subr.mxu0 0.0
  %729 = vmatpush2.msra.mxu0 0.0
  %730 = vmatprep.subr.mxu0 0.0
  %731 = vmatpush2.msra.mxu0 0.0
  %732 = vmatprep.subr.mxu0 0.0
  %733 = vmatpush2.msra.mxu0 0.0
  %734 = vmatprep.subr.mxu0 0.0
  %735 = vmatpush2.msra.mxu0 0.0
  %736 = vmatprep.mubr.f32.mxu0 0.0
  %737 = vmatmul.mubr.f32.gmra.mxu0 %v670
  %v738 = vpop.f32.mrf.mxu0
  %v739 = vadd.f32 %v135, %v738
  %v740 = vpop.f32.mrf.mxu0
  %741 = vdwg.mxu0
  %v742 = vadd.f32 %v664, %v739
  %v743 = vxor.u32 %v742, 2147483648
  %v744 = vmul.f32 %v743, 1.442695
  %v745 = vpow.pop %v744
  %v746 = vadd.f32 %v745, 1.0
  %v747 = vrcp.pop %v746
  %v748 = vmul.f32 1.0, %v747
  %750 = vrot.lane.b32.xlu0 %v739, 96
  %v751 = vpop.permute.xlu0 %750
  %v753 = vmul.f32 %v748, %v751
  %755 = vrot.lane.b32.xlu0 %v753, 32
  %v756 = vpop.permute.xlu0 %755
  %v758 = vadd.f32 %v664, %v756
  %v759 = vtanh.pop %v758
  %v760 = vsub.f32 1.0, %v748
  %762 = vrot.lane.b32.xlu0 %v759, 112
  %v763 = vpop.permute.xlu0 %762
  %v765 = vmul.f32 %v760, %v763
  %v766 = vmul.f32 %v748, %v591
  %v767 = vadd.f32 %v765, %v766
  %s768 = scalar_lea.vmem %s0, 8
  %v769 = vld [vmem:[%s768] sm:$0x3]
  %v771 = vsel %vm53, %v769, 0
  %773 = vmatprep.subr.mxu0 0.0
  %774 = vmatpush1.msra.mxu0 0.0
  %775 = vmatprep.subr.mxu0 0.0
  %776 = vmatpush1.msra.mxu0 0.0
  %777 = vmatprep.subr.mxu0 0.0
  %778 = vmatpush1.msra.mxu0 0.0
  %779 = vmatprep.subr.mxu0 0.0
  %780 = vmatpush1.msra.mxu0 0.0
  %781 = vmatprep.subr.mxu0 0.0
  %782 = vmatpush1.msra.mxu0 0.0
  %783 = vmatprep.subr.mxu0 0.0
  %784 = vmatpush1.msra.mxu0 0.0
  %785 = vmatprep.subr.mxu0 0.0
  %786 = vmatpush1.msra.mxu0 0.0
  %787 = vmatprep.subr.mxu0 0.0
  %788 = vmatpush1.msra.mxu0 0.0
  %789 = vmatprep.subr.mxu0 0.0
  %790 = vmatpush1.msra.mxu0 0.0
  %791 = vmatprep.subr.mxu0 0.0
  %792 = vmatpush1.msra.mxu0 0.0
  %793 = vmatprep.subr.mxu0 0.0
  %794 = vmatpush1.msra.mxu0 0.0
  %795 = vmatprep.subr.mxu0 0.0
  %796 = vmatpush1.msra.mxu0 0.0
  %797 = vmatprep.subr.mxu0 0.0
  %798 = vmatpush1.msra.mxu0 0.0
  %799 = vmatprep.subr.mxu0 0.0
  %800 = vmatpush1.msra.mxu0 0.0
  %801 = vmatprep.subr.mxu0 0.0
  %802 = vmatpush1.msra.mxu0 0.0
  %803 = vmatprep.subr.mxu0 0.0
  %804 = vmatpush1.msra.mxu0 %v59
  %805 = vmatprep.subr.mxu0 0.0
  %806 = vmatpush2.msra.mxu0 0.0
  %807 = vmatprep.subr.mxu0 0.0
  %808 = vmatpush2.msra.mxu0 0.0
  %809 = vmatprep.subr.mxu0 0.0
  %810 = vmatpush2.msra.mxu0 0.0
  %811 = vmatprep.subr.mxu0 0.0
  %812 = vmatpush2.msra.mxu0 0.0
  %813 = vmatprep.subr.mxu0 0.0
  %814 = vmatpush2.msra.mxu0 0.0
  %815 = vmatprep.subr.mxu0 0.0
  %816 = vmatpush2.msra.mxu0 0.0
  %817 = vmatprep.subr.mxu0 0.0
  %818 = vmatpush2.msra.mxu0 0.0
  %819 = vmatprep.subr.mxu0 0.0
  %820 = vmatpush2.msra.mxu0 0.0
  %821 = vmatprep.subr.mxu0 0.0
  %822 = vmatpush2.msra.mxu0 0.0
  %823 = vmatprep.subr.mxu0 0.0
  %824 = vmatpush2.msra.mxu0 0.0
  %825 = vmatprep.subr.mxu0 0.0
  %826 = vmatpush2.msra.mxu0 0.0
  %827 = vmatprep.subr.mxu0 0.0
  %828 = vmatpush2.msra.mxu0 0.0
  %829 = vmatprep.subr.mxu0 0.0
  %830 = vmatpush2.msra.mxu0 0.0
  %831 = vmatprep.subr.mxu0 0.0
  %832 = vmatpush2.msra.mxu0 0.0
  %833 = vmatprep.subr.mxu0 0.0
  %834 = vmatpush2.msra.mxu0 0.0
  %835 = vmatprep.subr.mxu0 0.0
  %836 = vmatpush2.msra.mxu0 0.0
  %837 = vmatprep.mubr.f32.mxu0 0.0
  %838 = vmatmul.mubr.f32.gmra.mxu0 %v771
  %v839 = vpop.f32.mrf.mxu0
  %v840 = vadd.f32 %v51, %v839
  %v841 = vpop.f32.mrf.mxu0
  %842 = vdwg.mxu0
  %844 = vrot.lane.b32.xlu0 %v767, 112
  %v845 = vpop.permute.xlu0 %844
  %v846 = vsel %vm137, %v845, 0
  %848 = vmatprep.subr.mxu0 0.0
  %849 = vmatpush1.msra.mxu0 0.0
  %850 = vmatprep.subr.mxu0 0.0
  %851 = vmatpush1.msra.mxu0 0.0
  %852 = vmatprep.subr.mxu0 0.0
  %853 = vmatpush1.msra.mxu0 0.0
  %854 = vmatprep.subr.mxu0 0.0
  %855 = vmatpush1.msra.mxu0 0.0
  %856 = vmatprep.subr.mxu0 0.0
  %857 = vmatpush1.msra.mxu0 0.0
  %858 = vmatprep.subr.mxu0 0.0
  %859 = vmatpush1.msra.mxu0 0.0
  %860 = vmatprep.subr.mxu0 0.0
  %861 = vmatpush1.msra.mxu0 0.0
  %862 = vmatprep.subr.mxu0 0.0
  %863 = vmatpush1.msra.mxu0 0.0
  %864 = vmatprep.subr.mxu0 0.0
  %865 = vmatpush1.msra.mxu0 0.0
  %866 = vmatprep.subr.mxu0 0.0
  %867 = vmatpush1.msra.mxu0 0.0
  %868 = vmatprep.subr.mxu0 0.0
  %869 = vmatpush1.msra.mxu0 0.0
  %870 = vmatprep.subr.mxu0 0.0
  %871 = vmatpush1.msra.mxu0 0.0
  %872 = vmatprep.subr.mxu0 0.0
  %873 = vmatpush1.msra.mxu0 0.0
  %874 = vmatprep.subr.mxu0 0.0
  %875 = vmatpush1.msra.mxu0 0.0
  %876 = vmatprep.subr.mxu0 0.0
  %877 = vmatpush1.msra.mxu0 %v42
  %878 = vmatprep.subr.mxu0 0.0
  %879 = vmatpush1.msra.mxu0 %v41
  %880 = vmatprep.subr.mxu0 0.0
  %881 = vmatpush2.msra.mxu0 0.0
  %882 = vmatprep.subr.mxu0 0.0
  %883 = vmatpush2.msra.mxu0 0.0
  %884 = vmatprep.subr.mxu0 0.0
  %885 = vmatpush2.msra.mxu0 0.0
  %886 = vmatprep.subr.mxu0 0.0
  %887 = vmatpush2.msra.mxu0 0.0
  %888 = vmatprep.subr.mxu0 0.0
  %889 = vmatpush2.msra.mxu0 0.0
  %890 = vmatprep.subr.mxu0 0.0
  %891 = vmatpush2.msra.mxu0 0.0
  %892 = vmatprep.subr.mxu0 0.0
  %893 = vmatpush2.msra.mxu0 0.0
  %894 = vmatprep.subr.mxu0 0.0
  %895 = vmatpush2.msra.mxu0 0.0
  %896 = vmatprep.subr.mxu0 0.0
  %897 = vmatpush2.msra.mxu0 0.0
  %898 = vmatprep.subr.mxu0 0.0
  %899 = vmatpush2.msra.mxu0 0.0
  %900 = vmatprep.subr.mxu0 0.0
  %901 = vmatpush2.msra.mxu0 0.0
  %902 = vmatprep.subr.mxu0 0.0
  %903 = vmatpush2.msra.mxu0 0.0
  %904 = vmatprep.subr.mxu0 0.0
  %905 = vmatpush2.msra.mxu0 0.0
  %906 = vmatprep.subr.mxu0 0.0
  %907 = vmatpush2.msra.mxu0 0.0
  %908 = vmatprep.subr.mxu0 0.0
  %909 = vmatpush2.msra.mxu0 0.0
  %910 = vmatprep.subr.mxu0 0.0
  %911 = vmatpush2.msra.mxu0 0.0
  %912 = vmatprep.mubr.f32.mxu0 0.0
  %913 = vmatmul.mubr.f32.gmra.mxu0 %v846
  %v914 = vpop.f32.mrf.mxu0
  %v915 = vadd.f32 %v135, %v914
  %v916 = vpop.f32.mrf.mxu0
  %917 = vdwg.mxu0
  %v918 = vadd.f32 %v840, %v915
  %v919 = vxor.u32 %v918, 2147483648
  %v920 = vmul.f32 %v919, 1.442695
  %v921 = vpow.pop %v920
  %v922 = vadd.f32 %v921, 1.0
  %v923 = vrcp.pop %v922
  %v924 = vmul.f32 1.0, %v923
  %926 = vrot.lane.b32.xlu0 %v915, 96
  %v927 = vpop.permute.xlu0 %926
  %v929 = vmul.f32 %v924, %v927
  %931 = vrot.lane.b32.xlu0 %v929, 32
  %v932 = vpop.permute.xlu0 %931
  %v934 = vadd.f32 %v840, %v932
  %v935 = vtanh.pop %v934
  %v936 = vsub.f32 1.0, %v924
  %938 = vrot.lane.b32.xlu0 %v935, 112
  %v939 = vpop.permute.xlu0 %938
  %v941 = vmul.f32 %v936, %v939
  %v942 = vmul.f32 %v924, %v767
  %v943 = vadd.f32 %v941, %v942
  %s944 = scalar_lea.vmem %s0, 10
  %v945 = vld [vmem:[%s944] sm:$0x3]
  %v947 = vsel %vm53, %v945, 0
  %949 = vmatprep.subr.mxu0 0.0
  %950 = vmatpush1.msra.mxu0 0.0
  %951 = vmatprep.subr.mxu0 0.0
  %952 = vmatpush1.msra.mxu0 0.0
  %953 = vmatprep.subr.mxu0 0.0
  %954 = vmatpush1.msra.mxu0 0.0
  %955 = vmatprep.subr.mxu0 0.0
  %956 = vmatpush1.msra.mxu0 0.0
  %957 = vmatprep.subr.mxu0 0.0
  %958 = vmatpush1.msra.mxu0 0.0
  %959 = vmatprep.subr.mxu0 0.0
  %960 = vmatpush1.msra.mxu0 0.0
  %961 = vmatprep.subr.mxu0 0.0
  %962 = vmatpush1.msra.mxu0 0.0
  %963 = vmatprep.subr.mxu0 0.0
  %964 = vmatpush1.msra.mxu0 0.0
  %965 = vmatprep.subr.mxu0 0.0
  %966 = vmatpush1.msra.mxu0 0.0
  %967 = vmatprep.subr.mxu0 0.0
  %968 = vmatpush1.msra.mxu0 0.0
  %969 = vmatprep.subr.mxu0 0.0
  %970 = vmatpush1.msra.mxu0 0.0
  %971 = vmatprep.subr.mxu0 0.0
  %972 = vmatpush1.msra.mxu0 0.0
  %973 = vmatprep.subr.mxu0 0.0
  %974 = vmatpush1.msra.mxu0 0.0
  %975 = vmatprep.subr.mxu0 0.0
  %976 = vmatpush1.msra.mxu0 0.0
  %977 = vmatprep.subr.mxu0 0.0
  %978 = vmatpush1.msra.mxu0 0.0
  %979 = vmatprep.subr.mxu0 0.0
  %980 = vmatpush1.msra.mxu0 %v59
  %981 = vmatprep.subr.mxu0 0.0
  %982 = vmatpush2.msra.mxu0 0.0
  %983 = vmatprep.subr.mxu0 0.0
  %984 = vmatpush2.msra.mxu0 0.0
  %985 = vmatprep.subr.mxu0 0.0
  %986 = vmatpush2.msra.mxu0 0.0
  %987 = vmatprep.subr.mxu0 0.0
  %988 = vmatpush2.msra.mxu0 0.0
  %989 = vmatprep.subr.mxu0 0.0
  %990 = vmatpush2.msra.mxu0 0.0
  %991 = vmatprep.subr.mxu0 0.0
  %992 = vmatpush2.msra.mxu0 0.0
  %993 = vmatprep.subr.mxu0 0.0
  %994 = vmatpush2.msra.mxu0 0.0
  %995 = vmatprep.subr.mxu0 0.0
  %996 = vmatpush2.msra.mxu0 0.0
  %997 = vmatprep.subr.mxu0 0.0
  %998 = vmatpush2.msra.mxu0 0.0
  %999 = vmatprep.subr.mxu0 0.0
  %1000 = vmatpush2.msra.mxu0 0.0
  %1001 = vmatprep.subr.mxu0 0.0
  %1002 = vmatpush2.msra.mxu0 0.0
  %1003 = vmatprep.subr.mxu0 0.0
  %1004 = vmatpush2.msra.mxu0 0.0
  %1005 = vmatprep.subr.mxu0 0.0
  %1006 = vmatpush2.msra.mxu0 0.0
  %1007 = vmatprep.subr.mxu0 0.0
  %1008 = vmatpush2.msra.mxu0 0.0
  %1009 = vmatprep.subr.mxu0 0.0
  %1010 = vmatpush2.msra.mxu0 0.0
  %1011 = vmatprep.subr.mxu0 0.0
  %1012 = vmatpush2.msra.mxu0 0.0
  %1013 = vmatprep.mubr.f32.mxu0 0.0
  %1014 = vmatmul.mubr.f32.gmra.mxu0 %v947
  %v1015 = vpop.f32.mrf.mxu0
  %v1016 = vadd.f32 %v51, %v1015
  %v1017 = vpop.f32.mrf.mxu0
  %1018 = vdwg.mxu0
  %1020 = vrot.lane.b32.xlu0 %v943, 112
  %v1021 = vpop.permute.xlu0 %1020
  %v1022 = vsel %vm137, %v1021, 0
  %1024 = vmatprep.subr.mxu0 0.0
  %1025 = vmatpush1.msra.mxu0 0.0
  %1026 = vmatprep.subr.mxu0 0.0
  %1027 = vmatpush1.msra.mxu0 0.0
  %1028 = vmatprep.subr.mxu0 0.0
  %1029 = vmatpush1.msra.mxu0 0.0
  %1030 = vmatprep.subr.mxu0 0.0
  %1031 = vmatpush1.msra.mxu0 0.0
  %1032 = vmatprep.subr.mxu0 0.0
  %1033 = vmatpush1.msra.mxu0 0.0
  %1034 = vmatprep.subr.mxu0 0.0
  %1035 = vmatpush1.msra.mxu0 0.0
  %1036 = vmatprep.subr.mxu0 0.0
  %1037 = vmatpush1.msra.mxu0 0.0
  %1038 = vmatprep.subr.mxu0 0.0
  %1039 = vmatpush1.msra.mxu0 0.0
  %1040 = vmatprep.subr.mxu0 0.0
  %1041 = vmatpush1.msra.mxu0 0.0
  %1042 = vmatprep.subr.mxu0 0.0
  %1043 = vmatpush1.msra.mxu0 0.0
  %1044 = vmatprep.subr.mxu0 0.0
  %1045 = vmatpush1.msra.mxu0 0.0
  %1046 = vmatprep.subr.mxu0 0.0
  %1047 = vmatpush1.msra.mxu0 0.0
  %1048 = vmatprep.subr.mxu0 0.0
  %1049 = vmatpush1.msra.mxu0 0.0
  %1050 = vmatprep.subr.mxu0 0.0
  %1051 = vmatpush1.msra.mxu0 0.0
  %1052 = vmatprep.subr.mxu0 0.0
  %1053 = vmatpush1.msra.mxu0 %v42
  %1054 = vmatprep.subr.mxu0 0.0
  %1055 = vmatpush1.msra.mxu0 %v41
  %1056 = vmatprep.subr.mxu0 0.0
  %1057 = vmatpush2.msra.mxu0 0.0
  %1058 = vmatprep.subr.mxu0 0.0
  %1059 = vmatpush2.msra.mxu0 0.0
  %1060 = vmatprep.subr.mxu0 0.0
  %1061 = vmatpush2.msra.mxu0 0.0
  %1062 = vmatprep.subr.mxu0 0.0
  %1063 = vmatpush2.msra.mxu0 0.0
  %1064 = vmatprep.subr.mxu0 0.0
  %1065 = vmatpush2.msra.mxu0 0.0
  %1066 = vmatprep.subr.mxu0 0.0
  %1067 = vmatpush2.msra.mxu0 0.0
  %1068 = vmatprep.subr.mxu0 0.0
  %1069 = vmatpush2.msra.mxu0 0.0
  %1070 = vmatprep.subr.mxu0 0.0
  %1071 = vmatpush2.msra.mxu0 0.0
  %1072 = vmatprep.subr.mxu0 0.0
  %1073 = vmatpush2.msra.mxu0 0.0
  %1074 = vmatprep.subr.mxu0 0.0
  %1075 = vmatpush2.msra.mxu0 0.0
  %1076 = vmatprep.subr.mxu0 0.0
  %1077 = vmatpush2.msra.mxu0 0.0
  %1078 = vmatprep.subr.mxu0 0.0
  %1079 = vmatpush2.msra.mxu0 0.0
  %1080 = vmatprep.subr.mxu0 0.0
  %1081 = vmatpush2.msra.mxu0 0.0
  %1082 = vmatprep.subr.mxu0 0.0
  %1083 = vmatpush2.msra.mxu0 0.0
  %1084 = vmatprep.subr.mxu0 0.0
  %1085 = vmatpush2.msra.mxu0 0.0
  %1086 = vmatprep.subr.mxu0 0.0
  %1087 = vmatpush2.msra.mxu0 0.0
  %1088 = vmatprep.mubr.f32.mxu0 0.0
  %1089 = vmatmul.mubr.f32.gmra.mxu0 %v1022
  %v1090 = vpop.f32.mrf.mxu0
  %v1091 = vadd.f32 %v135, %v1090
  %v1092 = vpop.f32.mrf.mxu0
  %1093 = vdwg.mxu0
  %v1094 = vadd.f32 %v1016, %v1091
  %v1095 = vxor.u32 %v1094, 2147483648
  %v1096 = vmul.f32 %v1095, 1.442695
  %v1097 = vpow.pop %v1096
  %v1098 = vadd.f32 %v1097, 1.0
  %v1099 = vrcp.pop %v1098
  %v1100 = vmul.f32 1.0, %v1099
  %1102 = vrot.lane.b32.xlu0 %v1091, 96
  %v1103 = vpop.permute.xlu0 %1102
  %v1105 = vmul.f32 %v1100, %v1103
  %1107 = vrot.lane.b32.xlu0 %v1105, 32
  %v1108 = vpop.permute.xlu0 %1107
  %v1110 = vadd.f32 %v1016, %v1108
  %v1111 = vtanh.pop %v1110
  %v1112 = vsub.f32 1.0, %v1100
  %1114 = vrot.lane.b32.xlu0 %v1111, 112
  %v1115 = vpop.permute.xlu0 %1114
  %v1117 = vmul.f32 %v1112, %v1115
  %v1118 = vmul.f32 %v1100, %v943
  %v1119 = vadd.f32 %v1117, %v1118
  %s1120 = scalar_lea.vmem %s0, 12
  %v1121 = vld [vmem:[%s1120] sm:$0x3]
  %v1123 = vsel %vm53, %v1121, 0
  %1125 = vmatprep.subr.mxu0 0.0
  %1126 = vmatpush1.msra.mxu0 0.0
  %1127 = vmatprep.subr.mxu0 0.0
  %1128 = vmatpush1.msra.mxu0 0.0
  %1129 = vmatprep.subr.mxu0 0.0
  %1130 = vmatpush1.msra.mxu0 0.0
  %1131 = vmatprep.subr.mxu0 0.0
  %1132 = vmatpush1.msra.mxu0 0.0
  %1133 = vmatprep.subr.mxu0 0.0
  %1134 = vmatpush1.msra.mxu0 0.0
  %1135 = vmatprep.subr.mxu0 0.0
  %1136 = vmatpush1.msra.mxu0 0.0
  %1137 = vmatprep.subr.mxu0 0.0
  %1138 = vmatpush1.msra.mxu0 0.0
  %1139 = vmatprep.subr.mxu0 0.0
  %1140 = vmatpush1.msra.mxu0 0.0
  %1141 = vmatprep.subr.mxu0 0.0
  %1142 = vmatpush1.msra.mxu0 0.0
  %1143 = vmatprep.subr.mxu0 0.0
  %1144 = vmatpush1.msra.mxu0 0.0
  %1145 = vmatprep.subr.mxu0 0.0
  %1146 = vmatpush1.msra.mxu0 0.0
  %1147 = vmatprep.subr.mxu0 0.0
  %1148 = vmatpush1.msra.mxu0 0.0
  %1149 = vmatprep.subr.mxu0 0.0
  %1150 = vmatpush1.msra.mxu0 0.0
  %1151 = vmatprep.subr.mxu0 0.0
  %1152 = vmatpush1.msra.mxu0 0.0
  %1153 = vmatprep.subr.mxu0 0.0
  %1154 = vmatpush1.msra.mxu0 0.0
  %1155 = vmatprep.subr.mxu0 0.0
  %1156 = vmatpush1.msra.mxu0 %v59
  %1157 = vmatprep.subr.mxu0 0.0
  %1158 = vmatpush2.msra.mxu0 0.0
  %1159 = vmatprep.subr.mxu0 0.0
  %1160 = vmatpush2.msra.mxu0 0.0
  %1161 = vmatprep.subr.mxu0 0.0
  %1162 = vmatpush2.msra.mxu0 0.0
  %1163 = vmatprep.subr.mxu0 0.0
  %1164 = vmatpush2.msra.mxu0 0.0
  %1165 = vmatprep.subr.mxu0 0.0
  %1166 = vmatpush2.msra.mxu0 0.0
  %1167 = vmatprep.subr.mxu0 0.0
  %1168 = vmatpush2.msra.mxu0 0.0
  %1169 = vmatprep.subr.mxu0 0.0
  %1170 = vmatpush2.msra.mxu0 0.0
  %1171 = vmatprep.subr.mxu0 0.0
  %1172 = vmatpush2.msra.mxu0 0.0
  %1173 = vmatprep.subr.mxu0 0.0
  %1174 = vmatpush2.msra.mxu0 0.0
  %1175 = vmatprep.subr.mxu0 0.0
  %1176 = vmatpush2.msra.mxu0 0.0
  %1177 = vmatprep.subr.mxu0 0.0
  %1178 = vmatpush2.msra.mxu0 0.0
  %1179 = vmatprep.subr.mxu0 0.0
  %1180 = vmatpush2.msra.mxu0 0.0
  %1181 = vmatprep.subr.mxu0 0.0
  %1182 = vmatpush2.msra.mxu0 0.0
  %1183 = vmatprep.subr.mxu0 0.0
  %1184 = vmatpush2.msra.mxu0 0.0
  %1185 = vmatprep.subr.mxu0 0.0
  %1186 = vmatpush2.msra.mxu0 0.0
  %1187 = vmatprep.subr.mxu0 0.0
  %1188 = vmatpush2.msra.mxu0 0.0
  %1189 = vmatprep.mubr.f32.mxu0 0.0
  %1190 = vmatmul.mubr.f32.gmra.mxu0 %v1123
  %v1191 = vpop.f32.mrf.mxu0
  %v1192 = vadd.f32 %v51, %v1191
  %v1193 = vpop.f32.mrf.mxu0
  %1194 = vdwg.mxu0
  %1196 = vrot.lane.b32.xlu0 %v1119, 112
  %v1197 = vpop.permute.xlu0 %1196
  %v1198 = vsel %vm137, %v1197, 0
  %1200 = vmatprep.subr.mxu0 0.0
  %1201 = vmatpush1.msra.mxu0 0.0
  %1202 = vmatprep.subr.mxu0 0.0
  %1203 = vmatpush1.msra.mxu0 0.0
  %1204 = vmatprep.subr.mxu0 0.0
  %1205 = vmatpush1.msra.mxu0 0.0
  %1206 = vmatprep.subr.mxu0 0.0
  %1207 = vmatpush1.msra.mxu0 0.0
  %1208 = vmatprep.subr.mxu0 0.0
  %1209 = vmatpush1.msra.mxu0 0.0
  %1210 = vmatprep.subr.mxu0 0.0
  %1211 = vmatpush1.msra.mxu0 0.0
  %1212 = vmatprep.subr.mxu0 0.0
  %1213 = vmatpush1.msra.mxu0 0.0
  %1214 = vmatprep.subr.mxu0 0.0
  %1215 = vmatpush1.msra.mxu0 0.0
  %1216 = vmatprep.subr.mxu0 0.0
  %1217 = vmatpush1.msra.mxu0 0.0
  %1218 = vmatprep.subr.mxu0 0.0
  %1219 = vmatpush1.msra.mxu0 0.0
  %1220 = vmatprep.subr.mxu0 0.0
  %1221 = vmatpush1.msra.mxu0 0.0
  %1222 = vmatprep.subr.mxu0 0.0
  %1223 = vmatpush1.msra.mxu0 0.0
  %1224 = vmatprep.subr.mxu0 0.0
  %1225 = vmatpush1.msra.mxu0 0.0
  %1226 = vmatprep.subr.mxu0 0.0
  %1227 = vmatpush1.msra.mxu0 0.0
  %1228 = vmatprep.subr.mxu0 0.0
  %1229 = vmatpush1.msra.mxu0 %v42
  %1230 = vmatprep.subr.mxu0 0.0
  %1231 = vmatpush1.msra.mxu0 %v41
  %1232 = vmatprep.subr.mxu0 0.0
  %1233 = vmatpush2.msra.mxu0 0.0
  %1234 = vmatprep.subr.mxu0 0.0
  %1235 = vmatpush2.msra.mxu0 0.0
  %1236 = vmatprep.subr.mxu0 0.0
  %1237 = vmatpush2.msra.mxu0 0.0
  %1238 = vmatprep.subr.mxu0 0.0
  %1239 = vmatpush2.msra.mxu0 0.0
  %1240 = vmatprep.subr.mxu0 0.0
  %1241 = vmatpush2.msra.mxu0 0.0
  %1242 = vmatprep.subr.mxu0 0.0
  %1243 = vmatpush2.msra.mxu0 0.0
  %1244 = vmatprep.subr.mxu0 0.0
  %1245 = vmatpush2.msra.mxu0 0.0
  %1246 = vmatprep.subr.mxu0 0.0
  %1247 = vmatpush2.msra.mxu0 0.0
  %1248 = vmatprep.subr.mxu0 0.0
  %1249 = vmatpush2.msra.mxu0 0.0
  %1250 = vmatprep.subr.mxu0 0.0
  %1251 = vmatpush2.msra.mxu0 0.0
  %1252 = vmatprep.subr.mxu0 0.0
  %1253 = vmatpush2.msra.mxu0 0.0
  %1254 = vmatprep.subr.mxu0 0.0
  %1255 = vmatpush2.msra.mxu0 0.0
  %1256 = vmatprep.subr.mxu0 0.0
  %1257 = vmatpush2.msra.mxu0 0.0
  %1258 = vmatprep.subr.mxu0 0.0
  %1259 = vmatpush2.msra.mxu0 0.0
  %1260 = vmatprep.subr.mxu0 0.0
  %1261 = vmatpush2.msra.mxu0 0.0
  %1262 = vmatprep.subr.mxu0 0.0
  %1263 = vmatpush2.msra.mxu0 0.0
  %1264 = vmatprep.mubr.f32.mxu0 0.0
  %1265 = vmatmul.mubr.f32.gmra.mxu0 %v1198
  %v1266 = vpop.f32.mrf.mxu0
  %v1267 = vadd.f32 %v135, %v1266
  %v1268 = vpop.f32.mrf.mxu0
  %1269 = vdwg.mxu0
  %v1270 = vadd.f32 %v1192, %v1267
  %v1271 = vxor.u32 %v1270, 2147483648
  %v1272 = vmul.f32 %v1271, 1.442695
  %v1273 = vpow.pop %v1272
  %v1274 = vadd.f32 %v1273, 1.0
  %v1275 = vrcp.pop %v1274
  %v1276 = vmul.f32 1.0, %v1275
  %1278 = vrot.lane.b32.xlu0 %v1267, 96
  %v1279 = vpop.permute.xlu0 %1278
  %v1281 = vmul.f32 %v1276, %v1279
  %1283 = vrot.lane.b32.xlu0 %v1281, 32
  %v1284 = vpop.permute.xlu0 %1283
  %v1286 = vadd.f32 %v1192, %v1284
  %v1287 = vtanh.pop %v1286
  %v1288 = vsub.f32 1.0, %v1276
  %1290 = vrot.lane.b32.xlu0 %v1287, 112
  %v1291 = vpop.permute.xlu0 %1290
  %v1293 = vmul.f32 %v1288, %v1291
  %v1294 = vmul.f32 %v1276, %v1119
  %v1295 = vadd.f32 %v1293, %v1294
  %s1296 = scalar_lea.vmem %s0, 14
  %v1297 = vld [vmem:[%s1296] sm:$0x3]
  %v1299 = vsel %vm53, %v1297, 0
  %1301 = vmatprep.subr.mxu0 0.0
  %1302 = vmatpush1.msra.mxu0 0.0
  %1303 = vmatprep.subr.mxu0 0.0
  %1304 = vmatpush1.msra.mxu0 0.0
  %1305 = vmatprep.subr.mxu0 0.0
  %1306 = vmatpush1.msra.mxu0 0.0
  %1307 = vmatprep.subr.mxu0 0.0
  %1308 = vmatpush1.msra.mxu0 0.0
  %1309 = vmatprep.subr.mxu0 0.0
  %1310 = vmatpush1.msra.mxu0 0.0
  %1311 = vmatprep.subr.mxu0 0.0
  %1312 = vmatpush1.msra.mxu0 0.0
  %1313 = vmatprep.subr.mxu0 0.0
  %1314 = vmatpush1.msra.mxu0 0.0
  %1315 = vmatprep.subr.mxu0 0.0
  %1316 = vmatpush1.msra.mxu0 0.0
  %1317 = vmatprep.subr.mxu0 0.0
  %1318 = vmatpush1.msra.mxu0 0.0
  %1319 = vmatprep.subr.mxu0 0.0
  %1320 = vmatpush1.msra.mxu0 0.0
  %1321 = vmatprep.subr.mxu0 0.0
  %1322 = vmatpush1.msra.mxu0 0.0
  %1323 = vmatprep.subr.mxu0 0.0
  %1324 = vmatpush1.msra.mxu0 0.0
  %1325 = vmatprep.subr.mxu0 0.0
  %1326 = vmatpush1.msra.mxu0 0.0
  %1327 = vmatprep.subr.mxu0 0.0
  %1328 = vmatpush1.msra.mxu0 0.0
  %1329 = vmatprep.subr.mxu0 0.0
  %1330 = vmatpush1.msra.mxu0 0.0
  %1331 = vmatprep.subr.mxu0 0.0
  %1332 = vmatpush1.msra.mxu0 %v59
  %1333 = vmatprep.subr.mxu0 0.0
  %1334 = vmatpush2.msra.mxu0 0.0
  %1335 = vmatprep.subr.mxu0 0.0
  %1336 = vmatpush2.msra.mxu0 0.0
  %1337 = vmatprep.subr.mxu0 0.0
  %1338 = vmatpush2.msra.mxu0 0.0
  %1339 = vmatprep.subr.mxu0 0.0
  %1340 = vmatpush2.msra.mxu0 0.0
  %1341 = vmatprep.subr.mxu0 0.0
  %1342 = vmatpush2.msra.mxu0 0.0
  %1343 = vmatprep.subr.mxu0 0.0
  %1344 = vmatpush2.msra.mxu0 0.0
  %1345 = vmatprep.subr.mxu0 0.0
  %1346 = vmatpush2.msra.mxu0 0.0
  %1347 = vmatprep.subr.mxu0 0.0
  %1348 = vmatpush2.msra.mxu0 0.0
  %1349 = vmatprep.subr.mxu0 0.0
  %1350 = vmatpush2.msra.mxu0 0.0
  %1351 = vmatprep.subr.mxu0 0.0
  %1352 = vmatpush2.msra.mxu0 0.0
  %1353 = vmatprep.subr.mxu0 0.0
  %1354 = vmatpush2.msra.mxu0 0.0
  %1355 = vmatprep.subr.mxu0 0.0
  %1356 = vmatpush2.msra.mxu0 0.0
  %1357 = vmatprep.subr.mxu0 0.0
  %1358 = vmatpush2.msra.mxu0 0.0
  %1359 = vmatprep.subr.mxu0 0.0
  %1360 = vmatpush2.msra.mxu0 0.0
  %1361 = vmatprep.subr.mxu0 0.0
  %1362 = vmatpush2.msra.mxu0 0.0
  %1363 = vmatprep.subr.mxu0 0.0
  %1364 = vmatpush2.msra.mxu0 0.0
  %1365 = vmatprep.mubr.f32.mxu0 0.0
  %1366 = vmatmul.mubr.f32.gmra.mxu0 %v1299
  %v1367 = vpop.f32.mrf.mxu0
  %v1368 = vadd.f32 %v51, %v1367
  %v1369 = vpop.f32.mrf.mxu0
  %1370 = vdwg.mxu0
  %1372 = vrot.lane.b32.xlu0 %v1295, 112
  %v1373 = vpop.permute.xlu0 %1372
  %v1374 = vsel %vm137, %v1373, 0
  %1376 = vmatprep.subr.mxu0 0.0
  %1377 = vmatpush1.msra.mxu0 0.0
  %1378 = vmatprep.subr.mxu0 0.0
  %1379 = vmatpush1.msra.mxu0 0.0
  %1380 = vmatprep.subr.mxu0 0.0
  %1381 = vmatpush1.msra.mxu0 0.0
  %1382 = vmatprep.subr.mxu0 0.0
  %1383 = vmatpush1.msra.mxu0 0.0
  %1384 = vmatprep.subr.mxu0 0.0
  %1385 = vmatpush1.msra.mxu0 0.0
  %1386 = vmatprep.subr.mxu0 0.0
  %1387 = vmatpush1.msra.mxu0 0.0
  %1388 = vmatprep.subr.mxu0 0.0
  %1389 = vmatpush1.msra.mxu0 0.0
  %1390 = vmatprep.subr.mxu0 0.0
  %1391 = vmatpush1.msra.mxu0 0.0
  %1392 = vmatprep.subr.mxu0 0.0
  %1393 = vmatpush1.msra.mxu0 0.0
  %1394 = vmatprep.subr.mxu0 0.0
  %1395 = vmatpush1.msra.mxu0 0.0
  %1396 = vmatprep.subr.mxu0 0.0
  %1397 = vmatpush1.msra.mxu0 0.0
  %1398 = vmatprep.subr.mxu0 0.0
  %1399 = vmatpush1.msra.mxu0 0.0
  %1400 = vmatprep.subr.mxu0 0.0
  %1401 = vmatpush1.msra.mxu0 0.0
  %1402 = vmatprep.subr.mxu0 0.0
  %1403 = vmatpush1.msra.mxu0 0.0
  %1404 = vmatprep.subr.mxu0 0.0
  %1405 = vmatpush1.msra.mxu0 %v42
  %1406 = vmatprep.subr.mxu0 0.0
  %1407 = vmatpush1.msra.mxu0 %v41
  %1408 = vmatprep.subr.mxu0 0.0
  %1409 = vmatpush2.msra.mxu0 0.0
  %1410 = vmatprep.subr.mxu0 0.0
  %1411 = vmatpush2.msra.mxu0 0.0
  %1412 = vmatprep.subr.mxu0 0.0
  %1413 = vmatpush2.msra.mxu0 0.0
  %1414 = vmatprep.subr.mxu0 0.0
  %1415 = vmatpush2.msra.mxu0 0.0
  %1416 = vmatprep.subr.mxu0 0.0
  %1417 = vmatpush2.msra.mxu0 0.0
  %1418 = vmatprep.subr.mxu0 0.0
  %1419 = vmatpush2.msra.mxu0 0.0
  %1420 = vmatprep.subr.mxu0 0.0
  %1421 = vmatpush2.msra.mxu0 0.0
  %1422 = vmatprep.subr.mxu0 0.0
  %1423 = vmatpush2.msra.mxu0 0.0
  %1424 = vmatprep.subr.mxu0 0.0
  %1425 = vmatpush2.msra.mxu0 0.0
  %1426 = vmatprep.subr.mxu0 0.0
  %1427 = vmatpush2.msra.mxu0 0.0
  %1428 = vmatprep.subr.mxu0 0.0
  %1429 = vmatpush2.msra.mxu0 0.0
  %1430 = vmatprep.subr.mxu0 0.0
  %1431 = vmatpush2.msra.mxu0 0.0
  %1432 = vmatprep.subr.mxu0 0.0
  %1433 = vmatpush2.msra.mxu0 0.0
  %1434 = vmatprep.subr.mxu0 0.0
  %1435 = vmatpush2.msra.mxu0 0.0
  %1436 = vmatprep.subr.mxu0 0.0
  %1437 = vmatpush2.msra.mxu0 0.0
  %1438 = vmatprep.subr.mxu0 0.0
  %1439 = vmatpush2.msra.mxu0 0.0
  %1440 = vmatprep.mubr.f32.mxu0 0.0
  %1441 = vmatmul.mubr.f32.gmra.mxu0 %v1374
  %v1442 = vpop.f32.mrf.mxu0
  %v1443 = vadd.f32 %v135, %v1442
  %v1444 = vpop.f32.mrf.mxu0
  %1445 = vdwg.mxu0
  %v1446 = vadd.f32 %v1368, %v1443
  %v1447 = vxor.u32 %v1446, 2147483648
  %v1448 = vmul.f32 %v1447, 1.442695
  %v1449 = vpow.pop %v1448
  %v1450 = vadd.f32 %v1449, 1.0
  %v1451 = vrcp.pop %v1450
  %v1452 = vmul.f32 1.0, %v1451
  %1454 = vrot.lane.b32.xlu0 %v1443, 96
  %v1455 = vpop.permute.xlu0 %1454
  %v1457 = vmul.f32 %v1452, %v1455
  %1459 = vrot.lane.b32.xlu0 %v1457, 32
  %v1460 = vpop.permute.xlu0 %1459
  %v1462 = vadd.f32 %v1368, %v1460
  %v1463 = vtanh.pop %v1462
  %v1464 = vsub.f32 1.0, %v1452
  %1466 = vrot.lane.b32.xlu0 %v1463, 112
  %v1467 = vpop.permute.xlu0 %1466
  %v1469 = vmul.f32 %v1464, %v1467
  %v1470 = vmul.f32 %v1452, %v1295
  %v1471 = vadd.f32 %v1469, %v1470
  %1473 = vrot.lane.b32.xlu0 %v1471, 112
  %v1474 = vpop.permute.xlu0 %1473
  %vm1476 = vcmask 123904
  %1477 = vst.msk [vmem:[#allocation2] sm:$0x3] %vm1476, %v1474
  // Predicated region
  $region42: #{tpu_custom_call.1} parent=0 // pred_check
    %p1478 = pneg %p34
  $region43: #{tpu_custom_call.1} parent=0 // pred_check_branch
    %1480 = sbr.rel (%p1478) target = $region45
  $region44: #{tpu_custom_call.1} parent=0 // pred_region
    %v1481 = vld [vmem:[%s5] sm:$0xff]
    %v1482 = vld [vmem:[%s5 + $0x8] sm:$0xff]
    %v1483 = vld [vmem:[%s6] sm:$0x1]
    %v1485 = vlaneseq
    %v1486 = vshrl.u32 %v1485, 7
    %v1487 = vsub.s32 0, %v1486
    %v1488 = vrot.slane %v1483, %v1487
    %v1490 = vsel %vm137, %v1474, 0
    %1492 = vmatprep.subr.mxu0 0.0
    %1493 = vmatpush1.msra.mxu0 0.0
    %1494 = vmatprep.subr.mxu0 0.0
    %1495 = vmatpush1.msra.mxu0 0.0
    %1496 = vmatprep.subr.mxu0 0.0
    %1497 = vmatpush1.msra.mxu0 0.0
    %1498 = vmatprep.subr.mxu0 0.0
    %1499 = vmatpush1.msra.mxu0 0.0
    %1500 = vmatprep.subr.mxu0 0.0
    %1501 = vmatpush1.msra.mxu0 0.0
    %1502 = vmatprep.subr.mxu0 0.0
    %1503 = vmatpush1.msra.mxu0 0.0
    %1504 = vmatprep.subr.mxu0 0.0
    %1505 = vmatpush1.msra.mxu0 0.0
    %1506 = vmatprep.subr.mxu0 0.0
    %1507 = vmatpush1.msra.mxu0 0.0
    %1508 = vmatprep.subr.mxu0 0.0
    %1509 = vmatpush1.msra.mxu0 0.0
    %1510 = vmatprep.subr.mxu0 0.0
    %1511 = vmatpush1.msra.mxu0 0.0
    %1512 = vmatprep.subr.mxu0 0.0
    %1513 = vmatpush1.msra.mxu0 0.0
    %1514 = vmatprep.subr.mxu0 0.0
    %1515 = vmatpush1.msra.mxu0 0.0
    %1516 = vmatprep.subr.mxu0 0.0
    %1517 = vmatpush1.msra.mxu0 0.0
    %1518 = vmatprep.subr.mxu0 0.0
    %1519 = vmatpush1.msra.mxu0 0.0
    %1520 = vmatprep.subr.mxu0 0.0
    %1521 = vmatpush1.msra.mxu0 %v1482
    %1522 = vmatprep.subr.mxu0 0.0
    %1523 = vmatpush1.msra.mxu0 %v1481
    %1524 = vmatprep.subr.mxu0 0.0
    %1525 = vmatpush2.msra.mxu0 0.0
    %1526 = vmatprep.subr.mxu0 0.0
    %1527 = vmatpush2.msra.mxu0 0.0
    %1528 = vmatprep.subr.mxu0 0.0
    %1529 = vmatpush2.msra.mxu0 0.0
    %1530 = vmatprep.subr.mxu0 0.0
    %1531 = vmatpush2.msra.mxu0 0.0
    %1532 = vmatprep.subr.mxu0 0.0
    %1533 = vmatpush2.msra.mxu0 0.0
    %1534 = vmatprep.subr.mxu0 0.0
    %1535 = vmatpush2.msra.mxu0 0.0
    %1536 = vmatprep.subr.mxu0 0.0
    %1537 = vmatpush2.msra.mxu0 0.0
    %1538 = vmatprep.subr.mxu0 0.0
    %1539 = vmatpush2.msra.mxu0 0.0
    %1540 = vmatprep.subr.mxu0 0.0
    %1541 = vmatpush2.msra.mxu0 0.0
    %1542 = vmatprep.subr.mxu0 0.0
    %1543 = vmatpush2.msra.mxu0 0.0
    %1544 = vmatprep.subr.mxu0 0.0
    %1545 = vmatpush2.msra.mxu0 0.0
    %1546 = vmatprep.subr.mxu0 0.0
    %1547 = vmatpush2.msra.mxu0 0.0
    %1548 = vmatprep.subr.mxu0 0.0
    %1549 = vmatpush2.msra.mxu0 0.0
    %1550 = vmatprep.subr.mxu0 0.0
    %1551 = vmatpush2.msra.mxu0 0.0
    %1552 = vmatprep.subr.mxu0 0.0
    %1553 = vmatpush2.msra.mxu0 0.0
    %1554 = vmatprep.subr.mxu0 0.0
    %1555 = vmatpush2.msra.mxu0 0.0
    %1556 = vmatprep.mubr.f32.mxu0 0.0
    %1557 = vmatmul.mubr.f32.gmra.mxu0 %v1490
    %v1558 = vpop.f32.mrf.mxu0
    %v1559 = vadd.f32 %v1488, %v1558
    %v1560 = vpop.f32.mrf.mxu0
    %1561 = vdwg.mxu0
    %v1562 = vtanh.pop %v1559
    %v1563 = vxor.u32 %v1559, 2147483648
    %v1564 = vmul.f32 %v1563, 1.442695
    %v1565 = vpow.pop %v1564
    %v1566 = vadd.f32 %v1565, 1.0
    %v1567 = vrcp.pop %v1566
    %v1568 = vmul.f32 1.0, %v1567
    %1570 = vrot.lane.b32.xlu0 %v1568, 112
    %v1571 = vpop.permute.xlu0 %1570
    %v1573 = vmul.f32 %v1562, %v1571
    %v1574 = vld [vmem:[%s7] sm:$0xff]
    %v1575 = vld [vmem:[%s7 + $0x8] sm:$0xff]
    %v1576 = vld [vmem:[#allocation3] sm:$0x1]
    %v1578 = vlaneseq
    %v1579 = vshrl.u32 %v1578, 7
    %v1580 = vsub.s32 0, %v1579
    %v1581 = vrot.slane %v1576, %v1580
    %v1584 = vsel %vm137, %v1573, 0
    %1586 = vmatprep.subr.mxu0 0.0
    %1587 = vmatpush1.msra.mxu0 0.0
    %1588 = vmatprep.subr.mxu0 0.0
    %1589 = vmatpush1.msra.mxu0 0.0
    %1590 = vmatprep.subr.mxu0 0.0
    %1591 = vmatpush1.msra.mxu0 0.0
    %1592 = vmatprep.subr.mxu0 0.0
    %1593 = vmatpush1.msra.mxu0 0.0
    %1594 = vmatprep.subr.mxu0 0.0
    %1595 = vmatpush1.msra.mxu0 0.0
    %1596 = vmatprep.subr.mxu0 0.0
    %1597 = vmatpush1.msra.mxu0 0.0
    %1598 = vmatprep.subr.mxu0 0.0
    %1599 = vmatpush1.msra.mxu0 0.0
    %1600 = vmatprep.subr.mxu0 0.0
    %1601 = vmatpush1.msra.mxu0 0.0
    %1602 = vmatprep.subr.mxu0 0.0
    %1603 = vmatpush1.msra.mxu0 0.0
    %1604 = vmatprep.subr.mxu0 0.0
    %1605 = vmatpush1.msra.mxu0 0.0
    %1606 = vmatprep.subr.mxu0 0.0
    %1607 = vmatpush1.msra.mxu0 0.0
    %1608 = vmatprep.subr.mxu0 0.0
    %1609 = vmatpush1.msra.mxu0 0.0
    %1610 = vmatprep.subr.mxu0 0.0
    %1611 = vmatpush1.msra.mxu0 0.0
    %1612 = vmatprep.subr.mxu0 0.0
    %1613 = vmatpush1.msra.mxu0 0.0
    %1614 = vmatprep.subr.mxu0 0.0
    %1615 = vmatpush1.msra.mxu0 %v1575
    %1616 = vmatprep.subr.mxu0 0.0
    %1617 = vmatpush1.msra.mxu0 %v1574
    %1618 = vmatprep.subr.mxu0 0.0
    %1619 = vmatpush2.msra.mxu0 0.0
    %1620 = vmatprep.subr.mxu0 0.0
    %1621 = vmatpush2.msra.mxu0 0.0
    %1622 = vmatprep.subr.mxu0 0.0
    %1623 = vmatpush2.msra.mxu0 0.0
    %1624 = vmatprep.subr.mxu0 0.0
    %1625 = vmatpush2.msra.mxu0 0.0
    %1626 = vmatprep.subr.mxu0 0.0
    %1627 = vmatpush2.msra.mxu0 0.0
    %1628 = vmatprep.subr.mxu0 0.0
    %1629 = vmatpush2.msra.mxu0 0.0
    %1630 = vmatprep.subr.mxu0 0.0
    %1631 = vmatpush2.msra.mxu0 0.0
    %1632 = vmatprep.subr.mxu0 0.0
    %1633 = vmatpush2.msra.mxu0 0.0
    %1634 = vmatprep.subr.mxu0 0.0
    %1635 = vmatpush2.msra.mxu0 0.0
    %1636 = vmatprep.subr.mxu0 0.0
    %1637 = vmatpush2.msra.mxu0 0.0
    %1638 = vmatprep.subr.mxu0 0.0
    %1639 = vmatpush2.msra.mxu0 0.0
    %1640 = vmatprep.subr.mxu0 0.0
    %1641 = vmatpush2.msra.mxu0 0.0
    %1642 = vmatprep.subr.mxu0 0.0
    %1643 = vmatpush2.msra.mxu0 0.0
    %1644 = vmatprep.subr.mxu0 0.0
    %1645 = vmatpush2.msra.mxu0 0.0
    %1646 = vmatprep.subr.mxu0 0.0
    %1647 = vmatpush2.msra.mxu0 0.0
    %1648 = vmatprep.subr.mxu0 0.0
    %1649 = vmatpush2.msra.mxu0 0.0
    %1650 = vmatprep.mubr.f32.mxu0 0.0
    %1651 = vmatmul.mubr.f32.gmra.mxu0 %v1584
    %v1652 = vpop.f32.mrf.mxu0
    %v1653 = vadd.f32 %v1581, %v1652
    %v1654 = vpop.f32.mrf.mxu0
    %1655 = vdwg.mxu0
    %v1656 = vxor.u32 %v1653, 2147483648
    %v1657 = vmul.f32 %v1656, 1.442695
    %v1658 = vpow.pop %v1657
    %v1659 = vadd.f32 %v1658, 1.0
    %v1660 = vrcp.pop %v1659
    %v1661 = vmul.f32 1.0, %v1660
    %vm1662 = vcmask 1024
    %1663 = vst.msk [vmem:[%s9] sm:$0x3] %vm1662, %v1661
  $region45: #{tpu_custom_call.1} parent=0 // pred_fallthru
    _
  // Predicated region
  $region46: #{tpu_custom_call.1} parent=0 // pred_check
    _
  $region47: #{tpu_custom_call.1} parent=0 // pred_check_branch
    %1665 = sbr.rel (0) target = $region49
  $region48: #{tpu_custom_call.1} parent=0 // pred_region
    _
  $region49: #{tpu_custom_call.1} parent=0 // pred_fallthru
    _
  // Predicated region
  $region50: #{tpu_custom_call.1} parent=0 // pred_check
    _
  $region51: #{tpu_custom_call.1} parent=0 // pred_check_branch
    %1667 = sbr.rel (0) target = $region53
  $region52: #{tpu_custom_call.1} parent=0 // pred_region
    _
  $region53: #{tpu_custom_call.1} parent=0 // pred_fallthru
    _

</llo_original>
